<compile_context>
chip_gen: v7x
topology: tpu7x:2x2x1
jax: 0.10.0
libtpu: 0.0.40
codegen_flags: <defaults>
</compile_context>

<pallas_src>
import functools
import math

import jax
import jax.numpy as jnp
from jax.experimental import pallas as pl
from jax.experimental.pallas import tpu as pltpu

_BN_EPS = 1e-5


def _round_up(a, b):
    return (a + b - 1) // b * b


def _default_vmem_limit():
    # ~3/4 of physical VMEM, capped at 100 MiB: ~48 MiB on v7x, ~96 MiB on v5e/v6e.
    try:
        cap = pltpu.get_tpu_info().vmem_capacity_bytes
        return int(min(cap * 3 // 4, 100 * 1024 * 1024))
    except Exception:
        return 48 * 1024 * 1024


_VMEM_LIMIT = _default_vmem_limit()


# ---------------------------------------------------------------------------
# Kernels
# ---------------------------------------------------------------------------
def _mm_leaky_kernel(x_ref, w_ref, o_ref):
    """Fused patch-matmul + LeakyReLU(0.2) (layers without BatchNorm)."""
    y = jnp.dot(x_ref[...], w_ref[...], preferred_element_type=jnp.float32)
    o_ref[...] = jnp.maximum(y, 0.2 * y).astype(o_ref.dtype)


def _mm_bn_act_kernel(x_ref, w_ref, gamma_ref, beta_ref, o_ref,
                      y_slab, sum_ref, sq_ref, *, true_m, tm):
    """Fused patch-matmul + training-mode BatchNorm + LeakyReLU(0.2).

    Grid runs over M tiles ("arbitrary").  Raw f32 matmul tiles are stored in a
    persistent VMEM slab, per-channel sum / sum-of-squares accumulate in VMEM
    scratch, and the last grid step normalizes the whole slab and writes the
    resident full output block (written back to HBM once).
    """
    i = pl.program_id(0)

    y = jnp.dot(x_ref[...], w_ref[...], preferred_element_type=jnp.float32)
    y_slab[i] = y                                       # (grid_m, tm, cp) f32 slab

    s = jnp.sum(y, axis=0, keepdims=True)               # (1, cp)
    s2 = jnp.sum(y * y, axis=0, keepdims=True)          # (1, cp)

    @pl.when(i == 0)
    def _():
        sum_ref[...] = s
        sq_ref[...] = s2

    @pl.when(i > 0)
    def _():
        sum_ref[...] = sum_ref[...] + s
        sq_ref[...] = sq_ref[...] + s2

    @pl.when(i == pl.num_programs(0) - 1)
    def _():
        # Biased variance + eps=1e-5 matches nn.BatchNorm2d in training mode.
        inv_m = 1.0 / true_m
        mean = sum_ref[...] * inv_m
        var = jnp.maximum(sq_ref[...] * inv_m - mean * mean, 0.0)
        inv = jax.lax.rsqrt(var + _BN_EPS)
        scale = gamma_ref[...] * inv                    # (1, cp)
        shift = beta_ref[...] - mean * scale            # (1, cp)
        n_tiles = y_slab.shape[0]
        for j in range(n_tiles):                        # static unroll; grid_m small
            z = y_slab[j] * scale + shift
            o_ref[pl.ds(j * tm, tm), :] = jnp.maximum(z, 0.2 * z).astype(o_ref.dtype)


# ---------------------------------------------------------------------------
# Plain-JAX glue
# ---------------------------------------------------------------------------
def _im2col_nhwc(x, kh, kw, stride, pad, c_total):
    """x: (N, H, W, C) -> patches (N*Ho*Wo, kh*kw*c_total), plus (Ho, Wo).

    Channels are zero-padded to `c_total` inside the same jnp.pad as the
    spatial padding, so patches come out lane-dense without a second HBM pad.
    """
    n, h, w, c = x.shape
    xp = jnp.pad(x, ((0, 0), (pad, pad), (pad, pad), (0, c_total - c)))
    ho = (h + 2 * pad - kh) // stride + 1
    wo = (w + 2 * pad - kw) // stride + 1
    cols = []
    for i in range(kh):
        for j in range(kw):
            cols.append(xp[:, i:i + stride * ho:stride, j:j + stride * wo:stride, :])
    p = jnp.stack(cols, axis=3)                          # (N, Ho, Wo, kh*kw, c_total)
    return p.reshape(n * ho * wo, kh * kw * c_total), ho, wo


def conv_layer(x, p, *, out_dtype=jnp.bfloat16):
    """One Conv(+BN)+LeakyReLU layer.  x is NHWC; returns NHWC."""
    n = x.shape[0]
    kh, kw, stride, pad = p["kh"], p["kw"], p["stride"], p["pad"]
    kp, cp, c_out = p["kp"], p["cp"], p["c_out"]
    use_bn = p["kind"] == "bn"

    patches, ho, wo = _im2col_nhwc(x.astype(jnp.bfloat16), kh, kw, stride, pad,
                                   c_total=p["c_in_pad"])
    m = patches.shape[0]

    if use_bn:
        tm = min(512, _round_up(m, 8))
    else:
        # cap at 256 so m>=512 gives grid_m>=2: the "parallel" M axis can then
        # shard across v7x's two TensorCores.
        tm = min(256, _round_up(m, 8))
    mp = _round_up(m, tm)
    if mp != m:
        patches = jnp.pad(patches, ((0, mp - m), (0, 0)))
    grid_m = mp // tm

    cparams = pltpu.CompilerParams(
        dimension_semantics=("arbitrary",) if use_bn else ("parallel",),
        vmem_limit_bytes=_VMEM_LIMIT)
    mm_flops = 2 * mp * kp * cp
    mm_bytes = mp * kp * 2 + kp * cp * 2 + mp * cp * 2

    if use_bn:
        out = pl.pallas_call(
            functools.partial(_mm_bn_act_kernel, true_m=float(m), tm=tm),
            out_shape=jax.ShapeDtypeStruct((mp, cp), out_dtype),
            grid=(grid_m,),
            in_specs=[pl.BlockSpec((tm, kp), lambda i: (i, 0)),
                      pl.BlockSpec((kp, cp), lambda i: (0, 0)),
                      pl.BlockSpec((1, cp), lambda i: (0, 0)),
                      pl.BlockSpec((1, cp), lambda i: (0, 0))],
            # full-array output block, constant index -> resident across the
            # grid, written back to HBM exactly once after the last step.
            out_specs=pl.BlockSpec((mp, cp), lambda i: (0, 0)),
            scratch_shapes=[pltpu.VMEM((grid_m, tm, cp), jnp.float32),
                            pltpu.VMEM((1, cp), jnp.float32),
                            pltpu.VMEM((1, cp), jnp.float32)],
            compiler_params=cparams,
            cost_estimate=pl.CostEstimate(flops=mm_flops, transcendentals=0,
                                          bytes_accessed=mm_bytes),
        )(patches, p["wmat"], p["gamma"], p["beta"])
    else:
        out = pl.pallas_call(
            _mm_leaky_kernel,
            out_shape=jax.ShapeDtypeStruct((mp, cp), out_dtype),
            grid=(grid_m,),
            in_specs=[pl.BlockSpec((tm, kp), lambda i: (i, 0)),
                      pl.BlockSpec((kp, cp), lambda i: (0, 0))],
            out_specs=pl.BlockSpec((tm, cp), lambda i: (i, 0)),
            compiler_params=cparams,
            cost_estimate=pl.CostEstimate(flops=mm_flops, transcendentals=0,
                                          bytes_accessed=mm_bytes),
        )(patches, p["wmat"])

    # Strip M / channel padding; stay NHWC for the next layer.  XLA fuses this
    # slice with the next layer's im2col pad/stack/reshape.
    return out[:m, :c_out].reshape(n, ho, wo, c_out)


def _final_layer(h, p):
    """Final Conv2d(C, 1, 2, 2, 0) + Sigmoid in plain JAX (c_out=1, M=batch)."""
    patches, _, _ = _im2col_nhwc(h.astype(jnp.float32), p["kh"], p["kw"],
                                 p["stride"], p["pad"], c_total=h.shape[-1])
    logits = patches @ p["wmat"]                         # (N*Ho*Wo, 1)
    return jax.nn.sigmoid(logits).reshape(-1)            # == view(-1,1).squeeze(1)


# ---------------------------------------------------------------------------
# Parameters
# ---------------------------------------------------------------------------
def init_discriminator_params(key, nc=3, ndf=64):
    """DCGAN-style init in PyTorch layout: conv ~ N(0,0.02), gamma ~ N(1,0.02), beta=0."""
    assert nc == 3, "this script implements the nc == 3 branch of the module"
    layer_cfg = [
        # (c_in, c_out, k, stride, pad, has_bn)
        (nc,      ndf,     4, 2, 1, False),
        (ndf,     ndf * 2, 4, 2, 1, True),
        (ndf * 2, ndf * 4, 4, 2, 1, True),
        (ndf * 4, ndf * 8, 4, 2, 1, True),
        (ndf * 8, 1,       2, 2, 0, False),
    ]
    params = []
    for (cin, cout, k, s, p, bn) in layer_cfg:
        key, k1, k2 = jax.random.split(key, 3)
        w = 0.02 * jax.random.normal(k1, (cout, cin, k, k), jnp.float32)
        if bn:
            gamma = 1.0 + 0.02 * jax.random.normal(k2, (cout,), jnp.float32)
        else:
            gamma = jnp.ones((cout,), jnp.float32)
        beta = jnp.zeros((cout,), jnp.float32)
        params.append(dict(w=w, gamma=gamma, beta=beta, stride=s, pad=p, use_bn=bn))
    return params


def prepare_discriminator_params(params):
    """One-time re-layout/padding of PyTorch-layout params into kernel layout."""
    prepped = []
    last = len(params) - 1
    for idx, p in enumerate(params):
        w = p["w"]
        c_out, c_in, kh, kw = w.shape
        if idx == last:
            # final 1-output conv runs in plain JAX; keep (K, 1) f32, unpadded.
            wmat = w.transpose(2, 3, 1, 0).reshape(kh * kw * c_in, c_out)
            prepped.append(dict(kind="final", wmat=wmat.astype(jnp.float32),
                                kh=kh, kw=kw, stride=p["stride"], pad=p["pad"]))
            continue
        # Pad C_in so K = kh*kw*c_in_pad is a multiple of 128 (lane-dense).
        c_align = 128 // math.gcd(kh * kw, 128)
        c_in_pad = _round_up(c_in, c_align)
        kp = kh * kw * c_in_pad
        cp = _round_up(c_out, 128)
        w_p = jnp.pad(w, ((0, cp - c_out), (0, c_in_pad - c_in), (0, 0), (0, 0)))
        # (cp, c_in_pad, kh, kw) -> (kh, kw, c_in_pad, cp) -> (K, cp)
        wmat = w_p.transpose(2, 3, 1, 0).reshape(kp, cp).astype(jnp.bfloat16)
        gamma_p = jnp.pad(p["gamma"], (0, cp - c_out),
                          constant_values=1.0).reshape(1, cp).astype(jnp.float32)
        beta_p = jnp.pad(p["beta"], (0, cp - c_out)).reshape(1, cp).astype(jnp.float32)
        prepped.append(dict(kind="bn" if p["use_bn"] else "plain",
                            wmat=wmat, gamma=gamma_p, beta=beta_p,
                            kh=kh, kw=kw, stride=p["stride"], pad=p["pad"],
                            c_in_pad=c_in_pad, c_out=c_out, kp=kp, cp=cp))
    return prepped


# ---------------------------------------------------------------------------
# Forward pass
# ---------------------------------------------------------------------------
def discriminator_forward(prepped, x_nchw):
    h = jnp.transpose(x_nchw, (0, 2, 3, 1))              # single NCHW -> NHWC
    out = None
    for p in prepped:
        if p["kind"] == "final":
            out = _final_layer(h, p)
        else:
            h = conv_layer(h, p)
    return out


if __name__ == "__main__":
    key = jax.random.PRNGKey(0)
    kx, kparam = jax.random.split(key)
    # Small shapes consistent with the module: batch=2, nc=3, 32x32 input, ndf=8
    # (channels 8 -> 16 -> 32 -> 64 -> 1; spatial 32 -> 16 -> 8 -> 4 -> 2 -> 1).
    x = jax.random.normal(kx, (2, 3, 32, 32), jnp.float32)
    raw_params = init_discriminator_params(kparam, nc=3, ndf=8)
    params = prepare_discriminator_params(raw_params)

    fwd = jax.jit(lambda a: discriminator_forward(params, a))
    out = jax.block_until_ready(fwd(x))

    assert out.shape == (2,), out.shape
    assert bool(jnp.all((out >= 0.0) & (out <= 1.0)))
    print("KERNEL_OK")
</pallas_src>

<mosaic_0001>
module attributes {stable_mosaic.version = 11 : i64} {
  func.func @_mm_leaky_kernel(%arg0: i32, %arg1: memref<256x128xbf16, #tpu.memory_space<vmem>>, %arg2: memref<128x128xbf16, #tpu.memory_space<vmem>>, %arg3: memref<256x128xbf16, #tpu.memory_space<vmem>>) attributes {dimension_semantics = [#tpu.dimension_semantics<parallel>], iteration_bounds = array<i64: 2>, scalar_prefetch = 0 : i64, scratch_operands = 0 : i64, tpu.core_type = #tpu.core_type<tc>, window_params = [{transform_indices = @transform_0, window_bounds = array<i64: 256, 128>}, {pipeline_mode = #tpu.pipeline_mode<synchronous>, transform_indices = @transform_1, window_bounds = array<i64: 128, 128>}, {transform_indices = @transform_2, window_bounds = array<i64: 256, 128>}]} {
    %c0 = arith.constant 0 : index
    %c0_0 = arith.constant 0 : index
    %0 = vector.load %arg1[%c0, %c0_0] : memref<256x128xbf16, #tpu.memory_space<vmem>>, vector<256x128xbf16>
    %c0_1 = arith.constant 0 : index
    %c0_2 = arith.constant 0 : index
    %1 = vector.load %arg2[%c0_1, %c0_2] : memref<128x128xbf16, #tpu.memory_space<vmem>>, vector<128x128xbf16>
    %cst = arith.constant dense<0.000000e+00> : vector<256x128xf32>
    %2 = tpu.matmul %0, %1, %cst {dimension_numbers = #tpu.dot_dimension_numbers<[1], [0], [0], [1], [0, 0, 1, 1], [], []>} : vector<256x128xbf16>, vector<128x128xbf16>, vector<256x128xf32> -> vector<256x128xf32>
    %cst_3 = arith.constant 2.000000e-01 : f32
    %3 = vector.broadcast %cst_3 : f32 to vector<256x128xf32>
    %4 = arith.mulf %3, %2 : vector<256x128xf32>
    %5 = arith.maximumf %2, %4 : vector<256x128xf32>
    %6 = arith.truncf %5 : vector<256x128xf32> to vector<256x128xbf16>
    %c0_4 = arith.constant 0 : index
    %c0_5 = arith.constant 0 : index
    %7 = vector.load %arg3[%c0_4, %c0_5] : memref<256x128xbf16, #tpu.memory_space<vmem>>, vector<256x128xbf16>
    tpu.vector_store %arg3[%c0_4, %c0_5], %6 {strides = array<i32>} : memref<256x128xbf16, #tpu.memory_space<vmem>>, vector<256x128xbf16>,
    return
  }
  func.func @transform_0(%arg0: i32) -> (i32, i32) {
    %c0_i32 = arith.constant 0 : i32
    %c0_i32_0 = arith.constant 0 : i32
    return %arg0, %c0_i32 : i32, i32
  }
  func.func @transform_1(%arg0: i32) -> (i32, i32) {
    %c0_i32 = arith.constant 0 : i32
    %c0_i32_0 = arith.constant 0 : i32
    %c0_i32_1 = arith.constant 0 : i32
    return %c0_i32, %c0_i32_0 : i32, i32
  }
  func.func @transform_2(%arg0: i32) -> (i32, i32) {
    %c0_i32 = arith.constant 0 : i32
    %c0_i32_0 = arith.constant 0 : i32
    return %arg0, %c0_i32 : i32, i32
  }
}

module attributes {stable_mosaic.version = 11 : i64} {
  func.func @_mm_bn_act_kernel(%arg0: i32, %arg1: memref<128x128xbf16, #tpu.memory_space<vmem>>, %arg2: memref<128x128xbf16, #tpu.memory_space<vmem>>, %arg3: memref<1x128xf32, #tpu.memory_space<vmem>>, %arg4: memref<1x128xf32, #tpu.memory_space<vmem>>, %arg5: memref<128x128xbf16, #tpu.memory_space<vmem>>, %arg6: memref<1x128x128xf32, #tpu.memory_space<vmem>>, %arg7: memref<1x128xf32, #tpu.memory_space<vmem>>, %arg8: memref<1x128xf32, #tpu.memory_space<vmem>>) attributes {dimension_semantics = [#tpu.dimension_semantics<arbitrary>], iteration_bounds = array<i64: 1>, scalar_prefetch = 0 : i64, scratch_operands = 3 : i64, tpu.core_type = #tpu.core_type<tc>, window_params = [{transform_indices = @transform_0, window_bounds = array<i64: 128, 128>}, {pipeline_mode = #tpu.pipeline_mode<synchronous>, transform_indices = @transform_1, window_bounds = array<i64: 128, 128>}, {pipeline_mode = #tpu.pipeline_mode<synchronous>, transform_indices = @transform_2, window_bounds = array<i64: 1, 128>}, {pipeline_mode = #tpu.pipeline_mode<synchronous>, transform_indices = @transform_3, window_bounds = array<i64: 1, 128>}, {pipeline_mode = #tpu.pipeline_mode<synchronous>, transform_indices = @transform_4, window_bounds = array<i64: 128, 128>}]} {
    %c0 = arith.constant 0 : index
    %c0_0 = arith.constant 0 : index
    %0 = vector.load %arg1[%c0, %c0_0] : memref<128x128xbf16, #tpu.memory_space<vmem>>, vector<128x128xbf16>
    %c0_1 = arith.constant 0 : index
    %c0_2 = arith.constant 0 : index
    %1 = vector.load %arg2[%c0_1, %c0_2] : memref<128x128xbf16, #tpu.memory_space<vmem>>, vector<128x128xbf16>
    %cst = arith.constant dense<0.000000e+00> : vector<128x128xf32>
    %2 = tpu.matmul %0, %1, %cst {dimension_numbers = #tpu.dot_dimension_numbers<[1], [0], [0], [1], [0, 0, 1, 1], [], []>} : vector<128x128xbf16>, vector<128x128xbf16>, vector<128x128xf32> -> vector<128x128xf32>
    %3 = arith.index_cast %arg0 : i32 to index
    %c0_3 = arith.constant 0 : index
    %c0_4 = arith.constant 0 : index
    %4 = vector.load %arg6[%3, %c0_3, %c0_4] : memref<1x128x128xf32, #tpu.memory_space<vmem>>, vector<1x128x128xf32>
    %5 = vector.shape_cast %4 : vector<1x128x128xf32> to vector<128x128xf32>
    %6 = vector.shape_cast %2 : vector<128x128xf32> to vector<1x128x128xf32>
    tpu.vector_store %arg6[%3, %c0_3, %c0_4], %6 {strides = array<i32>} : memref<1x128x128xf32, #tpu.memory_space<vmem>>, vector<1x128x128xf32>,
    %cst_5 = arith.constant dense<0.000000e+00> : vector<128xf32>
    %7 = vector.multi_reduction <add>, %2, %cst_5 [0] : vector<128x128xf32> to vector<128xf32>
    %8 = vector.shape_cast %7 : vector<128xf32> to vector<1x128xf32>
    %9 = arith.mulf %2, %2 : vector<128x128xf32>
    %cst_6 = arith.constant dense<0.000000e+00> : vector<128xf32>
    %10 = vector.multi_reduction <add>, %9, %cst_6 [0] : vector<128x128xf32> to vector<128xf32>
    %11 = vector.shape_cast %10 : vector<128xf32> to vector<1x128xf32>
    %c0_i32 = arith.constant 0 : i32
    %12 = arith.cmpi eq, %arg0, %c0_i32 : i32
    %13 = arith.extui %12 : i1 to i32
    %c0_i32_7 = arith.constant 0 : i32
    %14 = arith.cmpi ne, %13, %c0_i32_7 : i32
    scf.if %14 {
      %c0_12 = arith.constant 0 : index
      %c0_13 = arith.constant 0 : index
      %21 = vector.load %arg7[%c0_12, %c0_13] : memref<1x128xf32, #tpu.memory_space<vmem>>, vector<1x128xf32>
      tpu.vector_store %arg7[%c0_12, %c0_13], %8 {strides = array<i32>} : memref<1x128xf32, #tpu.memory_space<vmem>>, vector<1x128xf32>,
      %c0_14 = arith.constant 0 : index
      %c0_15 = arith.constant 0 : index
      %22 = vector.load %arg8[%c0_14, %c0_15] : memref<1x128xf32, #tpu.memory_space<vmem>>, vector<1x128xf32>
      tpu.vector_store %arg8[%c0_14, %c0_15], %11 {strides = array<i32>} : memref<1x128xf32, #tpu.memory_space<vmem>>, vector<1x128xf32>,
    } else {
    }
    %c0_i32_8 = arith.constant 0 : i32
    %15 = arith.cmpi sgt, %arg0, %c0_i32_8 : i32
    %16 = arith.extui %15 : i1 to i32
    %c0_i32_9 = arith.constant 0 : i32
    %17 = arith.cmpi ne, %16, %c0_i32_9 : i32
    scf.if %17 {
      %c0_12 = arith.constant 0 : index
      %c0_13 = arith.constant 0 : index
      %21 = vector.load %arg7[%c0_12, %c0_13] : memref<1x128xf32, #tpu.memory_space<vmem>>, vector<1x128xf32>
      %22 = arith.addf %21, %8 : vector<1x128xf32>
      %c0_14 = arith.constant 0 : index
      %c0_15 = arith.constant 0 : index
      %23 = vector.load %arg7[%c0_14, %c0_15] : memref<1x128xf32, #tpu.memory_space<vmem>>, vector<1x128xf32>
      tpu.vector_store %arg7[%c0_14, %c0_15], %22 {strides = array<i32>} : memref<1x128xf32, #tpu.memory_space<vmem>>, vector<1x128xf32>,
      %c0_16 = arith.constant 0 : index
      %c0_17 = arith.constant 0 : index
      %24 = vector.load %arg8[%c0_16, %c0_17] : memref<1x128xf32, #tpu.memory_space<vmem>>, vector<1x128xf32>
      %25 = arith.addf %24, %11 : vector<1x128xf32>
      %c0_18 = arith.constant 0 : index
      %c0_19 = arith.constant 0 : index
      %26 = vector.load %arg8[%c0_18, %c0_19] : memref<1x128xf32, #tpu.memory_space<vmem>>, vector<1x128xf32>
      tpu.vector_store %arg8[%c0_18, %c0_19], %25 {strides = array<i32>} : memref<1x128xf32, #tpu.memory_space<vmem>>, vector<1x128xf32>,
    } else {
    }
    %c0_i32_10 = arith.constant 0 : i32
    %18 = arith.cmpi eq, %arg0, %c0_i32_10 : i32
    %19 = arith.extui %18 : i1 to i32
    %c0_i32_11 = arith.constant 0 : i32
    %20 = arith.cmpi ne, %19, %c0_i32_11 : i32
    scf.if %20 {
      %c0_12 = arith.constant 0 : index
      %c0_13 = arith.constant 0 : index
      %21 = vector.load %arg7[%c0_12, %c0_13] : memref<1x128xf32, #tpu.memory_space<vmem>>, vector<1x128xf32>
      %cst_14 = arith.constant 7.812500e-03 : f32
      %22 = vector.broadcast %cst_14 : f32 to vector<1x128xf32>
      %23 = arith.mulf %21, %22 : vector<1x128xf32>
      %c0_15 = arith.constant 0 : index
      %c0_16 = arith.constant 0 : index
      %24 = vector.load %arg8[%c0_15, %c0_16] : memref<1x128xf32, #tpu.memory_space<vmem>>, vector<1x128xf32>
      %cst_17 = arith.constant 7.812500e-03 : f32
      %25 = vector.broadcast %cst_17 : f32 to vector<1x128xf32>
      %26 = arith.mulf %24, %25 : vector<1x128xf32>
      %27 = arith.mulf %23, %23 : vector<1x128xf32>
      %28 = arith.subf %26, %27 : vector<1x128xf32>
      %cst_18 = arith.constant 0.000000e+00 : f32
      %29 = vector.broadcast %cst_18 : f32 to vector<1x128xf32>
      %30 = arith.maximumf %28, %29 : vector<1x128xf32>
      %cst_19 = arith.constant 9.99999974E-6 : f32
      %31 = vector.broadcast %cst_19 : f32 to vector<1x128xf32>
      %32 = arith.addf %30, %31 : vector<1x128xf32>
      %33 = math.rsqrt %32 : vector<1x128xf32>
      %c0_20 = arith.constant 0 : index
      %c0_21 = arith.constant 0 : index
      %34 = vector.load %arg3[%c0_20, %c0_21] : memref<1x128xf32, #tpu.memory_space<vmem>>, vector<1x128xf32>
      %35 = arith.mulf %34, %33 : vector<1x128xf32>
      %c0_22 = arith.constant 0 : index
      %c0_23 = arith.constant 0 : index
      %36 = vector.load %arg4[%c0_22, %c0_23] : memref<1x128xf32, #tpu.memory_space<vmem>>, vector<1x128xf32>
      %37 = arith.mulf %23, %35 : vector<1x128xf32>
      %38 = arith.subf %36, %37 : vector<1x128xf32>
      %c0_24 = arith.constant 0 : index
      %c0_25 = arith.constant 0 : index
      %c0_26 = arith.constant 0 : index
      %39 = vector.load %arg6[%c0_24, %c0_25, %c0_26] : memref<1x128x128xf32, #tpu.memory_space<vmem>>, vector<1x128x128xf32>
      %40 = vector.shape_cast %39 : vector<1x128x128xf32> to vector<128x128xf32>
      %41 = vector.broadcast %35 : vector<1x128xf32> to vector<128x128xf32>
      %42 = arith.mulf %40, %41 : vector<128x128xf32>
      %43 = vector.broadcast %38 : vector<1x128xf32> to vector<128x128xf32>
      %44 = arith.addf %42, %43 : vector<128x128xf32>
      %cst_27 = arith.constant 2.000000e-01 : f32
      %45 = vector.broadcast %cst_27 : f32 to vector<128x128xf32>
      %46 = arith.mulf %45, %44 : vector<128x128xf32>
      %47 = arith.maximumf %44, %46 : vector<128x128xf32>
      %48 = arith.truncf %47 : vector<128x128xf32> to vector<128x128xbf16>
      %c0_28 = arith.constant 0 : index
      %c0_29 = arith.constant 0 : index
      %49 = vector.load %arg5[%c0_28, %c0_29] : memref<128x128xbf16, #tpu.memory_space<vmem>>, vector<128x128xbf16>
      tpu.vector_store %arg5[%c0_28, %c0_29], %48 {strides = array<i32>} : memref<128x128xbf16, #tpu.memory_space<vmem>>, vector<128x128xbf16>,
    } else {
    }
    return
  }
  func.func @transform_0(%arg0: i32) -> (i32, i32) {
    %c0_i32 = arith.constant 0 : i32
    %c0_i32_0 = arith.constant 0 : i32
    return %arg0, %c0_i32 : i32, i32
  }
  func.func @transform_1(%arg0: i32) -> (i32, i32) {
    %c0_i32 = arith.constant 0 : i32
    %c0_i32_0 = arith.constant 0 : i32
    %c0_i32_1 = arith.constant 0 : i32
    return %c0_i32, %c0_i32_0 : i32, i32
  }
  func.func @transform_2(%arg0: i32) -> (i32, i32) {
    %c0_i32 = arith.constant 0 : i32
    %c0_i32_0 = arith.constant 0 : i32
    %c0_i32_1 = arith.constant 0 : i32
    return %c0_i32, %c0_i32_0 : i32, i32
  }
  func.func @transform_3(%arg0: i32) -> (i32, i32) {
    %c0_i32 = arith.constant 0 : i32
    %c0_i32_0 = arith.constant 0 : i32
    %c0_i32_1 = arith.constant 0 : i32
    return %c0_i32, %c0_i32_0 : i32, i32
  }
  func.func @transform_4(%arg0: i32) -> (i32, i32) {
    %c0_i32 = arith.constant 0 : i32
    %c0_i32_0 = arith.constant 0 : i32
    %c0_i32_1 = arith.constant 0 : i32
    return %c0_i32, %c0_i32_0 : i32, i32
  }
}

module attributes {stable_mosaic.version = 11 : i64} {
  func.func @_mm_bn_act_kernel(%arg0: i32, %arg1: memref<32x256xbf16, #tpu.memory_space<vmem>>, %arg2: memref<256x128xbf16, #tpu.memory_space<vmem>>, %arg3: memref<1x128xf32, #tpu.memory_space<vmem>>, %arg4: memref<1x128xf32, #tpu.memory_space<vmem>>, %arg5: memref<32x128xbf16, #tpu.memory_space<vmem>>, %arg6: memref<1x32x128xf32, #tpu.memory_space<vmem>>, %arg7: memref<1x128xf32, #tpu.memory_space<vmem>>, %arg8: memref<1x128xf32, #tpu.memory_space<vmem>>) attributes {dimension_semantics = [#tpu.dimension_semantics<arbitrary>], iteration_bounds = array<i64: 1>, scalar_prefetch = 0 : i64, scratch_operands = 3 : i64, tpu.core_type = #tpu.core_type<tc>, window_params = [{transform_indices = @transform_0, window_bounds = array<i64: 32, 256>}, {pipeline_mode = #tpu.pipeline_mode<synchronous>, transform_indices = @transform_1, window_bounds = array<i64: 256, 128>}, {pipeline_mode = #tpu.pipeline_mode<synchronous>, transform_indices = @transform_2, window_bounds = array<i64: 1, 128>}, {pipeline_mode = #tpu.pipeline_mode<synchronous>, transform_indices = @transform_3, window_bounds = array<i64: 1, 128>}, {pipeline_mode = #tpu.pipeline_mode<synchronous>, transform_indices = @transform_4, window_bounds = array<i64: 32, 128>}]} {
    %c0 = arith.constant 0 : index
    %c0_0 = arith.constant 0 : index
    %0 = vector.load %arg1[%c0, %c0_0] : memref<32x256xbf16, #tpu.memory_space<vmem>>, vector<32x256xbf16>
    %c0_1 = arith.constant 0 : index
    %c0_2 = arith.constant 0 : index
    %1 = vector.load %arg2[%c0_1, %c0_2] : memref<256x128xbf16, #tpu.memory_space<vmem>>, vector<256x128xbf16>
    %cst = arith.constant dense<0.000000e+00> : vector<32x128xf32>
    %2 = tpu.matmul %0, %1, %cst {dimension_numbers = #tpu.dot_dimension_numbers<[1], [0], [0], [1], [0, 0, 1, 1], [], []>} : vector<32x256xbf16>, vector<256x128xbf16>, vector<32x128xf32> -> vector<32x128xf32>
    %3 = arith.index_cast %arg0 : i32 to index
    %c0_3 = arith.constant 0 : index
    %c0_4 = arith.constant 0 : index
    %4 = vector.load %arg6[%3, %c0_3, %c0_4] : memref<1x32x128xf32, #tpu.memory_space<vmem>>, vector<1x32x128xf32>
    %5 = vector.shape_cast %4 : vector<1x32x128xf32> to vector<32x128xf32>
    %6 = vector.shape_cast %2 : vector<32x128xf32> to vector<1x32x128xf32>
    tpu.vector_store %arg6[%3, %c0_3, %c0_4], %6 {strides = array<i32>} : memref<1x32x128xf32, #tpu.memory_space<vmem>>, vector<1x32x128xf32>,
    %cst_5 = arith.constant dense<0.000000e+00> : vector<128xf32>
    %7 = vector.multi_reduction <add>, %2, %cst_5 [0] : vector<32x128xf32> to vector<128xf32>
    %8 = vector.shape_cast %7 : vector<128xf32> to vector<1x128xf32>
    %9 = arith.mulf %2, %2 : vector<32x128xf32>
    %cst_6 = arith.constant dense<0.000000e+00> : vector<128xf32>
    %10 = vector.multi_reduction <add>, %9, %cst_6 [0] : vector<32x128xf32> to vector<128xf32>
    %11 = vector.shape_cast %10 : vector<128xf32> to vector<1x128xf32>
    %c0_i32 = arith.constant 0 : i32
    %12 = arith.cmpi eq, %arg0, %c0_i32 : i32
    %13 = arith.extui %12 : i1 to i32
    %c0_i32_7 = arith.constant 0 : i32
    %14 = arith.cmpi ne, %13, %c0_i32_7 : i32
    scf.if %14 {
      %c0_12 = arith.constant 0 : index
      %c0_13 = arith.constant 0 : index
      %21 = vector.load %arg7[%c0_12, %c0_13] : memref<1x128xf32, #tpu.memory_space<vmem>>, vector<1x128xf32>
      tpu.vector_store %arg7[%c0_12, %c0_13], %8 {strides = array<i32>} : memref<1x128xf32, #tpu.memory_space<vmem>>, vector<1x128xf32>,
      %c0_14 = arith.constant 0 : index
      %c0_15 = arith.constant 0 : index
      %22 = vector.load %arg8[%c0_14, %c0_15] : memref<1x128xf32, #tpu.memory_space<vmem>>, vector<1x128xf32>
      tpu.vector_store %arg8[%c0_14, %c0_15], %11 {strides = array<i32>} : memref<1x128xf32, #tpu.memory_space<vmem>>, vector<1x128xf32>,
    } else {
    }
    %c0_i32_8 = arith.constant 0 : i32
    %15 = arith.cmpi sgt, %arg0, %c0_i32_8 : i32
    %16 = arith.extui %15 : i1 to i32
    %c0_i32_9 = arith.constant 0 : i32
    %17 = arith.cmpi ne, %16, %c0_i32_9 : i32
    scf.if %17 {
      %c0_12 = arith.constant 0 : index
      %c0_13 = arith.constant 0 : index
      %21 = vector.load %arg7[%c0_12, %c0_13] : memref<1x128xf32, #tpu.memory_space<vmem>>, vector<1x128xf32>
      %22 = arith.addf %21, %8 : vector<1x128xf32>
      %c0_14 = arith.constant 0 : index
      %c0_15 = arith.constant 0 : index
      %23 = vector.load %arg7[%c0_14, %c0_15] : memref<1x128xf32, #tpu.memory_space<vmem>>, vector<1x128xf32>
      tpu.vector_store %arg7[%c0_14, %c0_15], %22 {strides = array<i32>} : memref<1x128xf32, #tpu.memory_space<vmem>>, vector<1x128xf32>,
      %c0_16 = arith.constant 0 : index
      %c0_17 = arith.constant 0 : index
      %24 = vector.load %arg8[%c0_16, %c0_17] : memref<1x128xf32, #tpu.memory_space<vmem>>, vector<1x128xf32>
      %25 = arith.addf %24, %11 : vector<1x128xf32>
      %c0_18 = arith.constant 0 : index
      %c0_19 = arith.constant 0 : index
      %26 = vector.load %arg8[%c0_18, %c0_19] : memref<1x128xf32, #tpu.memory_space<vmem>>, vector<1x128xf32>
      tpu.vector_store %arg8[%c0_18, %c0_19], %25 {strides = array<i32>} : memref<1x128xf32, #tpu.memory_space<vmem>>, vector<1x128xf32>,
    } else {
    }
    %c0_i32_10 = arith.constant 0 : i32
    %18 = arith.cmpi eq, %arg0, %c0_i32_10 : i32
    %19 = arith.extui %18 : i1 to i32
    %c0_i32_11 = arith.constant 0 : i32
    %20 = arith.cmpi ne, %19, %c0_i32_11 : i32
    scf.if %20 {
      %c0_12 = arith.constant 0 : index
      %c0_13 = arith.constant 0 : index
      %21 = vector.load %arg7[%c0_12, %c0_13] : memref<1x128xf32, #tpu.memory_space<vmem>>, vector<1x128xf32>
      %cst_14 = arith.constant 3.125000e-02 : f32
      %22 = vector.broadcast %cst_14 : f32 to vector<1x128xf32>
      %23 = arith.mulf %21, %22 : vector<1x128xf32>
      %c0_15 = arith.constant 0 : index
      %c0_16 = arith.constant 0 : index
      %24 = vector.load %arg8[%c0_15, %c0_16] : memref<1x128xf32, #tpu.memory_space<vmem>>, vector<1x128xf32>
      %cst_17 = arith.constant 3.125000e-02 : f32
      %25 = vector.broadcast %cst_17 : f32 to vector<1x128xf32>
      %26 = arith.mulf %24, %25 : vector<1x128xf32>
      %27 = arith.mulf %23, %23 : vector<1x128xf32>
      %28 = arith.subf %26, %27 : vector<1x128xf32>
      %cst_18 = arith.constant 0.000000e+00 : f32
      %29 = vector.broadcast %cst_18 : f32 to vector<1x128xf32>
      %30 = arith.maximumf %28, %29 : vector<1x128xf32>
      %cst_19 = arith.constant 9.99999974E-6 : f32
      %31 = vector.broadcast %cst_19 : f32 to vector<1x128xf32>
      %32 = arith.addf %30, %31 : vector<1x128xf32>
      %33 = math.rsqrt %32 : vector<1x128xf32>
      %c0_20 = arith.constant 0 : index
      %c0_21 = arith.constant 0 : index
      %34 = vector.load %arg3[%c0_20, %c0_21] : memref<1x128xf32, #tpu.memory_space<vmem>>, vector<1x128xf32>
      %35 = arith.mulf %34, %33 : vector<1x128xf32>
      %c0_22 = arith.constant 0 : index
      %c0_23 = arith.constant 0 : index
      %36 = vector.load %arg4[%c0_22, %c0_23] : memref<1x128xf32, #tpu.memory_space<vmem>>, vector<1x128xf32>
      %37 = arith.mulf %23, %35 : vector<1x128xf32>
      %38 = arith.subf %36, %37 : vector<1x128xf32>
      %c0_24 = arith.constant 0 : index
      %c0_25 = arith.constant 0 : index
      %c0_26 = arith.constant 0 : index
      %39 = vector.load %arg6[%c0_24, %c0_25, %c0_26] : memref<1x32x128xf32, #tpu.memory_space<vmem>>, vector<1x32x128xf32>
      %40 = vector.shape_cast %39 : vector<1x32x128xf32> to vector<32x128xf32>
      %41 = vector.broadcast %35 : vector<1x128xf32> to vector<32x128xf32>
      %42 = arith.mulf %40, %41 : vector<32x128xf32>
      %43 = vector.broadcast %38 : vector<1x128xf32> to vector<32x128xf32>
      %44 = arith.addf %42, %43 : vector<32x128xf32>
      %cst_27 = arith.constant 2.000000e-01 : f32
      %45 = vector.broadcast %cst_27 : f32 to vector<32x128xf32>
      %46 = arith.mulf %45, %44 : vector<32x128xf32>
      %47 = arith.maximumf %44, %46 : vector<32x128xf32>
      %48 = arith.truncf %47 : vector<32x128xf32> to vector<32x128xbf16>
      %c0_28 = arith.constant 0 : index
      %c0_29 = arith.constant 0 : index
      %49 = vector.load %arg5[%c0_28, %c0_29] : memref<32x128xbf16, #tpu.memory_space<vmem>>, vector<32x128xbf16>
      tpu.vector_store %arg5[%c0_28, %c0_29], %48 {strides = array<i32>} : memref<32x128xbf16, #tpu.memory_space<vmem>>, vector<32x128xbf16>,
    } else {
    }
    return
  }
  func.func @transform_0(%arg0: i32) -> (i32, i32) {
    %c0_i32 = arith.constant 0 : i32
    %c0_i32_0 = arith.constant 0 : i32
    return %arg0, %c0_i32 : i32, i32
  }
  func.func @transform_1(%arg0: i32) -> (i32, i32) {
    %c0_i32 = arith.constant 0 : i32
    %c0_i32_0 = arith.constant 0 : i32
    %c0_i32_1 = arith.constant 0 : i32
    return %c0_i32, %c0_i32_0 : i32, i32
  }
  func.func @transform_2(%arg0: i32) -> (i32, i32) {
    %c0_i32 = arith.constant 0 : i32
    %c0_i32_0 = arith.constant 0 : i32
    %c0_i32_1 = arith.constant 0 : i32
    return %c0_i32, %c0_i32_0 : i32, i32
  }
  func.func @transform_3(%arg0: i32) -> (i32, i32) {
    %c0_i32 = arith.constant 0 : i32
    %c0_i32_0 = arith.constant 0 : i32
    %c0_i32_1 = arith.constant 0 : i32
    return %c0_i32, %c0_i32_0 : i32, i32
  }
  func.func @transform_4(%arg0: i32) -> (i32, i32) {
    %c0_i32 = arith.constant 0 : i32
    %c0_i32_0 = arith.constant 0 : i32
    %c0_i32_1 = arith.constant 0 : i32
    return %c0_i32, %c0_i32_0 : i32, i32
  }
}

module attributes {stable_mosaic.version = 11 : i64} {
  func.func @_mm_bn_act_kernel(%arg0: i32, %arg1: memref<8x512xbf16, #tpu.memory_space<vmem>>, %arg2: memref<512x128xbf16, #tpu.memory_space<vmem>>, %arg3: memref<1x128xf32, #tpu.memory_space<vmem>>, %arg4: memref<1x128xf32, #tpu.memory_space<vmem>>, %arg5: memref<8x128xbf16, #tpu.memory_space<vmem>>, %arg6: memref<1x8x128xf32, #tpu.memory_space<vmem>>, %arg7: memref<1x128xf32, #tpu.memory_space<vmem>>, %arg8: memref<1x128xf32, #tpu.memory_space<vmem>>) attributes {dimension_semantics = [#tpu.dimension_semantics<arbitrary>], iteration_bounds = array<i64: 1>, scalar_prefetch = 0 : i64, scratch_operands = 3 : i64, tpu.core_type = #tpu.core_type<tc>, window_params = [{transform_indices = @transform_0, window_bounds = array<i64: 8, 512>}, {pipeline_mode = #tpu.pipeline_mode<synchronous>, transform_indices = @transform_1, window_bounds = array<i64: 512, 128>}, {pipeline_mode = #tpu.pipeline_mode<synchronous>, transform_indices = @transform_2, window_bounds = array<i64: 1, 128>}, {pipeline_mode = #tpu.pipeline_mode<synchronous>, transform_indices = @transform_3, window_bounds = array<i64: 1, 128>}, {pipeline_mode = #tpu.pipeline_mode<synchronous>, transform_indices = @transform_4, window_bounds = array<i64: 8, 128>}]} {
    %c0 = arith.constant 0 : index
    %c0_0 = arith.constant 0 : index
    %0 = vector.load %arg1[%c0, %c0_0] : memref<8x512xbf16, #tpu.memory_space<vmem>>, vector<8x512xbf16>
    %c0_1 = arith.constant 0 : index
    %c0_2 = arith.constant 0 : index
    %1 = vector.load %arg2[%c0_1, %c0_2] : memref<512x128xbf16, #tpu.memory_space<vmem>>, vector<512x128xbf16>
    %cst = arith.constant dense<0.000000e+00> : vector<8x128xf32>
    %2 = tpu.matmul %0, %1, %cst {dimension_numbers = #tpu.dot_dimension_numbers<[1], [0], [0], [1], [0, 0, 1, 1], [], []>} : vector<8x512xbf16>, vector<512x128xbf16>, vector<8x128xf32> -> vector<8x128xf32>
    %3 = arith.index_cast %arg0 : i32 to index
    %c0_3 = arith.constant 0 : index
    %c0_4 = arith.constant 0 : index
    %4 = vector.load %arg6[%3, %c0_3, %c0_4] : memref<1x8x128xf32, #tpu.memory_space<vmem>>, vector<1x8x128xf32>
    %5 = vector.shape_cast %4 : vector<1x8x128xf32> to vector<8x128xf32>
    %6 = vector.shape_cast %2 : vector<8x128xf32> to vector<1x8x128xf32>
    tpu.vector_store %arg6[%3, %c0_3, %c0_4], %6 {strides = array<i32>} : memref<1x8x128xf32, #tpu.memory_space<vmem>>, vector<1x8x128xf32>,
    %cst_5 = arith.constant dense<0.000000e+00> : vector<128xf32>
    %7 = vector.multi_reduction <add>, %2, %cst_5 [0] : vector<8x128xf32> to vector<128xf32>
    %8 = vector.shape_cast %7 : vector<128xf32> to vector<1x128xf32>
    %9 = arith.mulf %2, %2 : vector<8x128xf32>
    %cst_6 = arith.constant dense<0.000000e+00> : vector<128xf32>
    %10 = vector.multi_reduction <add>, %9, %cst_6 [0] : vector<8x128xf32> to vector<128xf32>
    %11 = vector.shape_cast %10 : vector<128xf32> to vector<1x128xf32>
    %c0_i32 = arith.constant 0 : i32
    %12 = arith.cmpi eq, %arg0, %c0_i32 : i32
    %13 = arith.extui %12 : i1 to i32
    %c0_i32_7 = arith.constant 0 : i32
    %14 = arith.cmpi ne, %13, %c0_i32_7 : i32
    scf.if %14 {
      %c0_12 = arith.constant 0 : index
      %c0_13 = arith.constant 0 : index
      %21 = vector.load %arg7[%c0_12, %c0_13] : memref<1x128xf32, #tpu.memory_space<vmem>>, vector<1x128xf32>
      tpu.vector_store %arg7[%c0_12, %c0_13], %8 {strides = array<i32>} : memref<1x128xf32, #tpu.memory_space<vmem>>, vector<1x128xf32>,
      %c0_14 = arith.constant 0 : index
      %c0_15 = arith.constant 0 : index
      %22 = vector.load %arg8[%c0_14, %c0_15] : memref<1x128xf32, #tpu.memory_space<vmem>>, vector<1x128xf32>
      tpu.vector_store %arg8[%c0_14, %c0_15], %11 {strides = array<i32>} : memref<1x128xf32, #tpu.memory_space<vmem>>, vector<1x128xf32>,
    } else {
    }
    %c0_i32_8 = arith.constant 0 : i32
    %15 = arith.cmpi sgt, %arg0, %c0_i32_8 : i32
    %16 = arith.extui %15 : i1 to i32
    %c0_i32_9 = arith.constant 0 : i32
    %17 = arith.cmpi ne, %16, %c0_i32_9 : i32
    scf.if %17 {
      %c0_12 = arith.constant 0 : index
      %c0_13 = arith.constant 0 : index
      %21 = vector.load %arg7[%c0_12, %c0_13] : memref<1x128xf32, #tpu.memory_space<vmem>>, vector<1x128xf32>
      %22 = arith.addf %21, %8 : vector<1x128xf32>
      %c0_14 = arith.constant 0 : index
      %c0_15 = arith.constant 0 : index
      %23 = vector.load %arg7[%c0_14, %c0_15] : memref<1x128xf32, #tpu.memory_space<vmem>>, vector<1x128xf32>
      tpu.vector_store %arg7[%c0_14, %c0_15], %22 {strides = array<i32>} : memref<1x128xf32, #tpu.memory_space<vmem>>, vector<1x128xf32>,
      %c0_16 = arith.constant 0 : index
      %c0_17 = arith.constant 0 : index
      %24 = vector.load %arg8[%c0_16, %c0_17] : memref<1x128xf32, #tpu.memory_space<vmem>>, vector<1x128xf32>
      %25 = arith.addf %24, %11 : vector<1x128xf32>
      %c0_18 = arith.constant 0 : index
      %c0_19 = arith.constant 0 : index
      %26 = vector.load %arg8[%c0_18, %c0_19] : memref<1x128xf32, #tpu.memory_space<vmem>>, vector<1x128xf32>
      tpu.vector_store %arg8[%c0_18, %c0_19], %25 {strides = array<i32>} : memref<1x128xf32, #tpu.memory_space<vmem>>, vector<1x128xf32>,
    } else {
    }
    %c0_i32_10 = arith.constant 0 : i32
    %18 = arith.cmpi eq, %arg0, %c0_i32_10 : i32
    %19 = arith.extui %18 : i1 to i32
    %c0_i32_11 = arith.constant 0 : i32
    %20 = arith.cmpi ne, %19, %c0_i32_11 : i32
    scf.if %20 {
      %c0_12 = arith.constant 0 : index
      %c0_13 = arith.constant 0 : index
      %21 = vector.load %arg7[%c0_12, %c0_13] : memref<1x128xf32, #tpu.memory_space<vmem>>, vector<1x128xf32>
      %cst_14 = arith.constant 1.250000e-01 : f32
      %22 = vector.broadcast %cst_14 : f32 to vector<1x128xf32>
      %23 = arith.mulf %21, %22 : vector<1x128xf32>
      %c0_15 = arith.constant 0 : index
      %c0_16 = arith.constant 0 : index
      %24 = vector.load %arg8[%c0_15, %c0_16] : memref<1x128xf32, #tpu.memory_space<vmem>>, vector<1x128xf32>
      %cst_17 = arith.constant 1.250000e-01 : f32
      %25 = vector.broadcast %cst_17 : f32 to vector<1x128xf32>
      %26 = arith.mulf %24, %25 : vector<1x128xf32>
      %27 = arith.mulf %23, %23 : vector<1x128xf32>
      %28 = arith.subf %26, %27 : vector<1x128xf32>
      %cst_18 = arith.constant 0.000000e+00 : f32
      %29 = vector.broadcast %cst_18 : f32 to vector<1x128xf32>
      %30 = arith.maximumf %28, %29 : vector<1x128xf32>
      %cst_19 = arith.constant 9.99999974E-6 : f32
      %31 = vector.broadcast %cst_19 : f32 to vector<1x128xf32>
      %32 = arith.addf %30, %31 : vector<1x128xf32>
      %33 = math.rsqrt %32 : vector<1x128xf32>
      %c0_20 = arith.constant 0 : index
      %c0_21 = arith.constant 0 : index
      %34 = vector.load %arg3[%c0_20, %c0_21] : memref<1x128xf32, #tpu.memory_space<vmem>>, vector<1x128xf32>
      %35 = arith.mulf %34, %33 : vector<1x128xf32>
      %c0_22 = arith.constant 0 : index
      %c0_23 = arith.constant 0 : index
      %36 = vector.load %arg4[%c0_22, %c0_23] : memref<1x128xf32, #tpu.memory_space<vmem>>, vector<1x128xf32>
      %37 = arith.mulf %23, %35 : vector<1x128xf32>
      %38 = arith.subf %36, %37 : vector<1x128xf32>
      %c0_24 = arith.constant 0 : index
      %c0_25 = arith.constant 0 : index
      %c0_26 = arith.constant 0 : index
      %39 = vector.load %arg6[%c0_24, %c0_25, %c0_26] : memref<1x8x128xf32, #tpu.memory_space<vmem>>, vector<1x8x128xf32>
      %40 = vector.shape_cast %39 : vector<1x8x128xf32> to vector<8x128xf32>
      %41 = vector.broadcast %35 : vector<1x128xf32> to vector<8x128xf32>
      %42 = arith.mulf %40, %41 : vector<8x128xf32>
      %43 = vector.broadcast %38 : vector<1x128xf32> to vector<8x128xf32>
      %44 = arith.addf %42, %43 : vector<8x128xf32>
      %cst_27 = arith.constant 2.000000e-01 : f32
      %45 = vector.broadcast %cst_27 : f32 to vector<8x128xf32>
      %46 = arith.mulf %45, %44 : vector<8x128xf32>
      %47 = arith.maximumf %44, %46 : vector<8x128xf32>
      %48 = arith.truncf %47 : vector<8x128xf32> to vector<8x128xbf16>
      %c0_28 = arith.constant 0 : index
      %c0_29 = arith.constant 0 : index
      %49 = vector.load %arg5[%c0_28, %c0_29] : memref<8x128xbf16, #tpu.memory_space<vmem>>, vector<8x128xbf16>
      tpu.vector_store %arg5[%c0_28, %c0_29], %48 {strides = array<i32>} : memref<8x128xbf16, #tpu.memory_space<vmem>>, vector<8x128xbf16>,
    } else {
    }
    return
  }
  func.func @transform_0(%arg0: i32) -> (i32, i32) {
    %c0_i32 = arith.constant 0 : i32
    %c0_i32_0 = arith.constant 0 : i32
    return %arg0, %c0_i32 : i32, i32
  }
  func.func @transform_1(%arg0: i32) -> (i32, i32) {
    %c0_i32 = arith.constant 0 : i32
    %c0_i32_0 = arith.constant 0 : i32
    %c0_i32_1 = arith.constant 0 : i32
    return %c0_i32, %c0_i32_0 : i32, i32
  }
  func.func @transform_2(%arg0: i32) -> (i32, i32) {
    %c0_i32 = arith.constant 0 : i32
    %c0_i32_0 = arith.constant 0 : i32
    %c0_i32_1 = arith.constant 0 : i32
    return %c0_i32, %c0_i32_0 : i32, i32
  }
  func.func @transform_3(%arg0: i32) -> (i32, i32) {
    %c0_i32 = arith.constant 0 : i32
    %c0_i32_0 = arith.constant 0 : i32
    %c0_i32_1 = arith.constant 0 : i32
    return %c0_i32, %c0_i32_0 : i32, i32
  }
  func.func @transform_4(%arg0: i32) -> (i32, i32) {
    %c0_i32 = arith.constant 0 : i32
    %c0_i32_0 = arith.constant 0 : i32
    %c0_i32_1 = arith.constant 0 : i32
    return %c0_i32, %c0_i32_0 : i32, i32
  }
}

</mosaic_0001>

<llo_original>
// kernel: _lambda_.4
$region0: #{_lambda_.4}
  #allocation0 [shape = 'u32[]', space=smem, size = 0x4, offset = 0x4, fixed_abs, tag = 'smem constant byte address 0x4 - core index']
  #allocation1 [shape = 'u32[144,128]{1,0:T(1,128)}', space=vmem, size = 0x12000, scoped, tag = 'internal scratch']
  %s0 = inlined_call_operand.vmem [shape: bf16[512,128], index: 0, kind: input, shape index: {}]
  %s1 = inlined_call_operand.vmem [shape: bf16[128,128], index: 1, kind: input, shape index: {}]
  %s2 = inlined_call_operand.vmem [shape: bf16[512,128], index: 2, kind: output, shape index: {}]
  %s3 = sld [smem:[#allocation0]]
  $region41: #{_lambda_.4} parent=0
    _
  %s5 = ssub.s32 1, %s3
  %s6 = scalar_select 0, %s5, %s3
  loop: start=0, step=1, limit=4
  $region2: #{_lambda_.4} parent=0 // loop_pre_header
    _
  $region3: #{_lambda_.4} parent=0 // loop_header
    %s8 = sphi 0, %s12
    %p9 = scmp.ge.s32.totalorder %s8, 4
    %s18 = sphi 0, %s20
    %s21 = sphi 0, %s18
    %s22 = sphi 0, %s21
    %s38 = sphi 0, %s22
    %s42 = sphi 0, %s42
    %s44 = sphi 0, %s42
    %s45 = sphi 0, %s44
    %s59 = sphi 0, %s45
    %s65 = sphi 0, %s67
    %s68 = sphi 0, %s65
    %s69 = sphi 0, %s68
    %s85 = sphi 0, %s69
  $region4: #{_lambda_.4} parent=0 // loop_header_branch
    %11 = sbr.rel (%p9) target = $region8
  $region5: #{_lambda_.4} parent=0 // loop_body
    %s13 = ssub.s32 %s8, 1
    %s14 = ssub.s32 %s8, 2
    %s15 = sadd.s32 %s8, 1
    %s16 = ssub.s32 %s8, %s15
    %p17 = scmp.eq.s32.totalorder %s16, 0
    %s19 = sadd.s32 %s18, 1
    %s20 = scalar_select %p17, %s18, %s19
    %p23 = pneg %p17
    %p24 = scmp.eq.s32.totalorder %s8, 1
    %p25 = por %p23, %p24
    %p26 = scmp.ne.s32.totalorder %s18, %s21
    %p27 = scmp.eq.s32.totalorder %s8, 0
    %p28 = por %p26, %p27
    %p29 = scmp.ne.s32.totalorder %s18, %s21
    %p30 = scmp.eq.s32.totalorder %s13, 1
    %p31 = por %p29, %p30
    %p32 = scmp.ne.s32.totalorder %s21, %s22
    %p33 = scmp.eq.s32.totalorder %s13, 0
    %p34 = por %p32, %p33
    %p35 = scmp.ne.s32.totalorder %s21, %s22
    %p36 = scmp.eq.s32.totalorder %s14, 1
    %p37 = por %p35, %p36
    %p39 = scmp.ne.s32.totalorder %s22, %s38
    %p40 = scmp.eq.s32.totalorder %s14, 0
    %p41 = por %p39, %p40
    %s43 = sadd.s32 %s42, 1
    %p46 = scmp.eq.s32.totalorder %s8, 1
    %p47 = scmp.ne.s32.totalorder %s42, %s44
    %p48 = scmp.eq.s32.totalorder %s8, 0
    %p49 = por %p47, %p48
    %p50 = scmp.ne.s32.totalorder %s42, %s44
    %p51 = scmp.eq.s32.totalorder %s13, 1
    %p52 = por %p50, %p51
    %p53 = scmp.ne.s32.totalorder %s44, %s45
    %p54 = scmp.eq.s32.totalorder %s13, 0
    %p55 = por %p53, %p54
    %p56 = scmp.ne.s32.totalorder %s44, %s45
    %p57 = scmp.eq.s32.totalorder %s14, 1
    %p58 = por %p56, %p57
    %p60 = scmp.ne.s32.totalorder %s45, %s59
    %p61 = scmp.eq.s32.totalorder %s14, 0
    %p62 = por %p60, %p61
    %s63 = ssub.s32 %s8, %s15
    %p64 = scmp.eq.s32.totalorder %s63, 0
    %s66 = sadd.s32 %s65, 1
    %s67 = scalar_select %p64, %s65, %s66
    %p70 = pneg %p64
    %p71 = scmp.eq.s32.totalorder %s8, 1
    %p72 = por %p70, %p71
    %p73 = scmp.ne.s32.totalorder %s65, %s68
    %p74 = scmp.eq.s32.totalorder %s8, 0
    %p75 = por %p73, %p74
    %p76 = scmp.ne.s32.totalorder %s65, %s68
    %p77 = scmp.eq.s32.totalorder %s13, 1
    %p78 = por %p76, %p77
    %p79 = scmp.ne.s32.totalorder %s68, %s69
    %p80 = scmp.eq.s32.totalorder %s13, 0
    %p81 = por %p79, %p80
    %p82 = scmp.ne.s32.totalorder %s68, %s69
    %p83 = scmp.eq.s32.totalorder %s14, 1
    %p84 = por %p82, %p83
    %p86 = scmp.ne.s32.totalorder %s69, %s85
    %p87 = scmp.eq.s32.totalorder %s14, 0
    %p88 = por %p86, %p87
    %p89 = scmp.le.s32.totalorder 1, %s8
    %p90 = scmp.lt.s32.totalorder %s8, 3
    %p91 = pnand %p89, %p90
    %p92 = pneg %p91
    // Predicated region
    $region9: #{_lambda_.4} parent=5 // pred_check
      _
    $region10: #{_lambda_.4} parent=5 // pred_check_branch
      %94 = sbr.rel (%p91) target = $region12
    $region11: #{_lambda_.4} parent=5 // pred_region
      %s95 = ssub.s32 %s8, 1
      // Predicated region
      $region13: #{_lambda_.4} parent=11 // pred_check
        %p96 = pneg %p55
      $region14: #{_lambda_.4} parent=11 // pred_check_branch
        %98 = sbr.rel (%p96) target = $region16
      $region15: #{_lambda_.4} parent=11 // pred_region
        _
      $region16: #{_lambda_.4} parent=11 // pred_fallthru
        _
    $region12: #{_lambda_.4} parent=5 // pred_fallthru
      _
    %p99 = scmp.lt.s32.totalorder %s8, 2
    // Predicated region
    $region17: #{_lambda_.4} parent=5 // pred_check
      %p100 = pneg %p99
    $region18: #{_lambda_.4} parent=5 // pred_check_branch
      %102 = sbr.rel (%p100) target = $region20
    $region19: #{_lambda_.4} parent=5 // pred_region
      // Predicated region
      $region21: #{_lambda_.4} parent=19 // pred_check
        %p103 = pneg %p28
      $region22: #{_lambda_.4} parent=19 // pred_check_branch
        %105 = sbr.rel (%p103) target = $region24
      $region23: #{_lambda_.4} parent=19 // pred_region
        %s106 = smul.u32 32, %s8
        %p107 = scmp.lt.s32.totalorder %s106, 63
        %s108 = scalar_select %p107, %s106, 63
        %s109 = smul.addr %s108, 4
        %s110 = scalar_lea.vmem %s0, %s109
        %s111 = smul.u32 32, %s8
      $region24: #{_lambda_.4} parent=19 // pred_fallthru
        _
    $region20: #{_lambda_.4} parent=5 // pred_fallthru
      _
    %p112 = scmp.le.s32.totalorder 1, %s8
    %p113 = scmp.lt.s32.totalorder %s8, 3
    %p114 = pnand %p112, %p113
    %p115 = pneg %p114
    // Predicated region
    $region25: #{_lambda_.4} parent=5 // pred_check
      _
    $region26: #{_lambda_.4} parent=5 // pred_check_branch
      %117 = sbr.rel (%p114) target = $region28
    $region27: #{_lambda_.4} parent=5 // pred_region
      %s118 = ssub.s32 %s8, 1
      %s119 = smul.u32 32, %s13
      %p120 = scmp.lt.s32.totalorder %s119, 63
      %s121 = scalar_select %p120, %s119, 63
      %s122 = smul.addr %s121, 4
      %s123 = scalar_lea.vmem %s0, %s122
      %p124 = pneg %p34
      %p125 = pneg %p31
      %p126 = pneg %p55
      %p127 = pneg %p52
      %p128 = pneg %p81
      %p129 = pneg %p78
      %s130 = smul.u32 32, %s13
      %p131 = scmp.lt.s32.totalorder %s130, 63
      %s132 = scalar_select %p131, %s130, 63
      %s133 = smul.addr %s132, 4
      %s134 = scalar_lea.vmem %s2, %s133
      %s135 = smul.u32 32, %s13
      %p136 = scmp.lt.s32.totalorder %s135, 63
      %s137 = scalar_select %p136, %s135, 63
      %s138 = smul.addr %s137, 4
      %s139 = scalar_lea.vmem %s0, %s138
      %s140 = smul.u32 32, %s13
      %s141 = smul.u32 32, %s13
      %p142 = scmp.lt.s32.totalorder %s141, 63
      %s143 = scalar_select %p142, %s141, 63
      %s144 = smul.addr %s143, 4
      %s145 = scalar_lea.vmem %s2, %s144
      %s146 = smul.u32 32, %s13
      %v148 = vld [vmem:[%s139] sm:$0xf]
      %v149 = vld [vmem:[%s139 + $0x4] sm:$0xf]
      %v150 = vld [vmem:[%s139 + $0x8] sm:$0xf]
      %v151 = vld [vmem:[%s139 + $0xc] sm:$0xf]
      %v152 = vld [vmem:[%s139 + $0x10] sm:$0xf]
      %v153 = vld [vmem:[%s139 + $0x14] sm:$0xf]
      %v154 = vld [vmem:[%s139 + $0x18] sm:$0xf]
      %v155 = vld [vmem:[%s139 + $0x1c] sm:$0xf]
      %v156 = vld [vmem:[%s139 + $0x20] sm:$0xf]
      %v157 = vld [vmem:[%s139 + $0x24] sm:$0xf]
      %v158 = vld [vmem:[%s139 + $0x28] sm:$0xf]
      %v159 = vld [vmem:[%s139 + $0x2c] sm:$0xf]
      %v160 = vld [vmem:[%s139 + $0x30] sm:$0xf]
      %v161 = vld [vmem:[%s139 + $0x34] sm:$0xf]
      %v162 = vld [vmem:[%s139 + $0x38] sm:$0xf]
      %v163 = vld [vmem:[%s139 + $0x3c] sm:$0xf]
      %v164 = vld [vmem:[%s139 + $0x40] sm:$0xf]
      %v165 = vld [vmem:[%s139 + $0x44] sm:$0xf]
      %v166 = vld [vmem:[%s139 + $0x48] sm:$0xf]
      %v167 = vld [vmem:[%s139 + $0x4c] sm:$0xf]
      %v168 = vld [vmem:[%s139 + $0x50] sm:$0xf]
      %v169 = vld [vmem:[%s139 + $0x54] sm:$0xf]
      %v170 = vld [vmem:[%s139 + $0x58] sm:$0xf]
      %v171 = vld [vmem:[%s139 + $0x5c] sm:$0xf]
      %v172 = vld [vmem:[%s139 + $0x60] sm:$0xf]
      %v173 = vld [vmem:[%s139 + $0x64] sm:$0xf]
      %v174 = vld [vmem:[%s139 + $0x68] sm:$0xf]
      %v175 = vld [vmem:[%s139 + $0x6c] sm:$0xf]
      %v176 = vld [vmem:[%s139 + $0x70] sm:$0xf]
      %v177 = vld [vmem:[%s139 + $0x74] sm:$0xf]
      %v178 = vld [vmem:[%s139 + $0x78] sm:$0xf]
      %v179 = vld [vmem:[%s139 + $0x7c] sm:$0xf]
      %v180 = vld [vmem:[%s1] sm:$0xf]
      %v181 = vld [vmem:[%s1 + $0x4] sm:$0xf]
      %v182 = vld [vmem:[%s1 + $0x8] sm:$0xf]
      %v183 = vld [vmem:[%s1 + $0xc] sm:$0xf]
      %v184 = vld [vmem:[%s1 + $0x10] sm:$0xf]
      %v185 = vld [vmem:[%s1 + $0x14] sm:$0xf]
      %v186 = vld [vmem:[%s1 + $0x18] sm:$0xf]
      %v187 = vld [vmem:[%s1 + $0x1c] sm:$0xf]
      %v188 = vld [vmem:[%s1 + $0x20] sm:$0xf]
      %v189 = vld [vmem:[%s1 + $0x24] sm:$0xf]
      %v190 = vld [vmem:[%s1 + $0x28] sm:$0xf]
      %v191 = vld [vmem:[%s1 + $0x2c] sm:$0xf]
      %v192 = vld [vmem:[%s1 + $0x30] sm:$0xf]
      %v193 = vld [vmem:[%s1 + $0x34] sm:$0xf]
      %v194 = vld [vmem:[%s1 + $0x38] sm:$0xf]
      %v195 = vld [vmem:[%s1 + $0x3c] sm:$0xf]
      %v228 = vunpack.c.l.b16 %v148
      %v229 = vunpack.c.l.b16 %v149
      %v230 = vunpack.c.l.b16 %v150
      %v231 = vunpack.c.l.b16 %v151
      %v232 = vunpack.c.l.b16 %v152
      %v233 = vunpack.c.l.b16 %v153
      %v234 = vunpack.c.l.b16 %v154
      %v235 = vunpack.c.l.b16 %v155
      %v236 = vunpack.c.l.b16 %v156
      %v237 = vunpack.c.l.b16 %v157
      %v238 = vunpack.c.l.b16 %v158
      %v239 = vunpack.c.l.b16 %v159
      %v240 = vunpack.c.l.b16 %v160
      %v241 = vunpack.c.l.b16 %v161
      %v242 = vunpack.c.l.b16 %v162
      %v243 = vunpack.c.l.b16 %v163
      %v244 = vunpack.c.l.b16 %v164
      %v245 = vunpack.c.l.b16 %v165
      %v246 = vunpack.c.l.b16 %v166
      %v247 = vunpack.c.l.b16 %v167
      %v248 = vunpack.c.l.b16 %v168
      %v249 = vunpack.c.l.b16 %v169
      %v250 = vunpack.c.l.b16 %v170
      %v251 = vunpack.c.l.b16 %v171
      %v252 = vunpack.c.l.b16 %v172
      %v253 = vunpack.c.l.b16 %v173
      %v254 = vunpack.c.l.b16 %v174
      %v255 = vunpack.c.l.b16 %v175
      %v256 = vunpack.c.l.b16 %v176
      %v257 = vunpack.c.l.b16 %v177
      %v258 = vunpack.c.l.b16 %v178
      %v259 = vunpack.c.l.b16 %v179
      %v260 = vpack.c.b16 %v229, %v228
      %v261 = vpack.c.b16 %v231, %v230
      %v262 = vpack.c.b16 %v233, %v232
      %v263 = vpack.c.b16 %v235, %v234
      %v264 = vpack.c.b16 %v237, %v236
      %v265 = vpack.c.b16 %v239, %v238
      %v266 = vpack.c.b16 %v241, %v240
      %v267 = vpack.c.b16 %v243, %v242
      %v268 = vpack.c.b16 %v245, %v244
      %v269 = vpack.c.b16 %v247, %v246
      %v270 = vpack.c.b16 %v249, %v248
      %v271 = vpack.c.b16 %v251, %v250
      %v272 = vpack.c.b16 %v253, %v252
      %v273 = vpack.c.b16 %v255, %v254
      %v274 = vpack.c.b16 %v257, %v256
      %v275 = vpack.c.b16 %v259, %v258
      %v308 = vunpack.c.l.b16 %v180
      %v309 = vunpack.c.l.b16 %v181
      %v310 = vunpack.c.l.b16 %v182
      %v311 = vunpack.c.l.b16 %v183
      %v312 = vunpack.c.l.b16 %v184
      %v313 = vunpack.c.l.b16 %v185
      %v314 = vunpack.c.l.b16 %v186
      %v315 = vunpack.c.l.b16 %v187
      %v316 = vunpack.c.l.b16 %v188
      %v317 = vunpack.c.l.b16 %v189
      %v318 = vunpack.c.l.b16 %v190
      %v319 = vunpack.c.l.b16 %v191
      %v320 = vunpack.c.l.b16 %v192
      %v321 = vunpack.c.l.b16 %v193
      %v322 = vunpack.c.l.b16 %v194
      %v323 = vunpack.c.l.b16 %v195
      %v324 = vpack.c.b16 %v309, %v308
      %v325 = vpack.c.b16 %v311, %v310
      %v326 = vpack.c.b16 %v313, %v312
      %v327 = vpack.c.b16 %v315, %v314
      %v328 = vpack.c.b16 %v317, %v316
      %v329 = vpack.c.b16 %v319, %v318
      %v330 = vpack.c.b16 %v321, %v320
      %v331 = vpack.c.b16 %v323, %v322
      %340 = vmatprep.subr.bf16.mxu0 0
      %341 = vmatpush1.bf16.msra.mxu0 %v324
      %342 = vmatprep.subr.bf16.mxu0 0
      %343 = vmatpush1.bf16.msra.mxu0 %v325
      %344 = vmatprep.subr.bf16.mxu0 0
      %345 = vmatpush1.bf16.msra.mxu0 %v326
      %346 = vmatprep.subr.bf16.mxu0 0
      %347 = vmatpush1.bf16.msra.mxu0 %v327
      %348 = vmatprep.subr.bf16.mxu0 0
      %349 = vmatpush1.bf16.msra.mxu0 %v328
      %350 = vmatprep.subr.bf16.mxu0 0
      %351 = vmatpush1.bf16.msra.mxu0 %v329
      %352 = vmatprep.subr.bf16.mxu0 0
      %353 = vmatpush1.bf16.msra.mxu0 %v330
      %354 = vmatprep.subr.bf16.mxu0 0
      %355 = vmatpush1.bf16.msra.mxu0 %v331
      %356 = vmatprep.subr.bf16.mxu0 0
      %357 = vmatpush1.bf16.msra.mxu0 0
      %358 = vmatprep.subr.bf16.mxu0 0
      %359 = vmatpush1.bf16.msra.mxu0 0
      %360 = vmatprep.subr.bf16.mxu0 0
      %361 = vmatpush1.bf16.msra.mxu0 0
      %362 = vmatprep.subr.bf16.mxu0 0
      %363 = vmatpush1.bf16.msra.mxu0 0
      %364 = vmatprep.subr.bf16.mxu0 0
      %365 = vmatpush1.bf16.msra.mxu0 0
      %366 = vmatprep.subr.bf16.mxu0 0
      %367 = vmatpush1.bf16.msra.mxu0 0
      %368 = vmatprep.subr.bf16.mxu0 0
      %369 = vmatpush1.bf16.msra.mxu0 0
      %370 = vmatprep.subr.bf16.mxu0 0
      %371 = vmatpush1.bf16.msra.mxu0 0
      %372 = vmatprep.mubr.bf16.mxu0 0
      %373 = vmatmul.mubr.bf16.gmra.mrb[0].mxu0 %v260
      %v374 = vpop.f32.mrb[0].mxu0
      %v375 = vadd.f32 0.0, %v374
      %v376 = vpop.f32.mrb[0].mxu0
      %v377 = vpop.f32.mrb[0].mxu0
      %v378 = vadd.f32 0.0, %v377
      %v379 = vpop.f32.mrb[0].mxu0
      %380 = vmatprep.mubr.bf16.mxu0 0
      %381 = vmatmul.mubr.bf16.gmra.mrb[0].mxu0 %v261
      %v382 = vpop.f32.mrb[0].mxu0
      %v383 = vadd.f32 0.0, %v382
      %v384 = vpop.f32.mrb[0].mxu0
      %v385 = vpop.f32.mrb[0].mxu0
      %v386 = vadd.f32 0.0, %v385
      %v387 = vpop.f32.mrb[0].mxu0
      %388 = vmatprep.mubr.bf16.mxu0 0
      %389 = vmatmul.mubr.bf16.gmra.mrb[0].mxu0 %v262
      %v390 = vpop.f32.mrb[0].mxu0
      %v391 = vadd.f32 0.0, %v390
      %v392 = vpop.f32.mrb[0].mxu0
      %v393 = vpop.f32.mrb[0].mxu0
      %v394 = vadd.f32 0.0, %v393
      %v395 = vpop.f32.mrb[0].mxu0
      %396 = vmatprep.mubr.bf16.mxu0 0
      %397 = vmatmul.mubr.bf16.gmra.mrb[0].mxu0 %v263
      %v398 = vpop.f32.mrb[0].mxu0
      %v399 = vadd.f32 0.0, %v398
      %v400 = vpop.f32.mrb[0].mxu0
      %v401 = vpop.f32.mrb[0].mxu0
      %v402 = vadd.f32 0.0, %v401
      %v403 = vpop.f32.mrb[0].mxu0
      %404 = vmatprep.mubr.bf16.mxu0 0
      %405 = vmatmul.mubr.bf16.gmra.mrb[0].mxu0 %v264
      %v406 = vpop.f32.mrb[0].mxu0
      %v407 = vadd.f32 0.0, %v406
      %v408 = vpop.f32.mrb[0].mxu0
      %v409 = vpop.f32.mrb[0].mxu0
      %v410 = vadd.f32 0.0, %v409
      %v411 = vpop.f32.mrb[0].mxu0
      %412 = vmatprep.mubr.bf16.mxu0 0
      %413 = vmatmul.mubr.bf16.gmra.mrb[0].mxu0 %v265
      %v414 = vpop.f32.mrb[0].mxu0
      %v415 = vadd.f32 0.0, %v414
      %v416 = vpop.f32.mrb[0].mxu0
      %v417 = vpop.f32.mrb[0].mxu0
      %v418 = vadd.f32 0.0, %v417
      %v419 = vpop.f32.mrb[0].mxu0
      %420 = vmatprep.mubr.bf16.mxu0 0
      %421 = vmatmul.mubr.bf16.gmra.mrb[0].mxu0 %v266
      %v422 = vpop.f32.mrb[0].mxu0
      %v423 = vadd.f32 0.0, %v422
      %v424 = vpop.f32.mrb[0].mxu0
      %v425 = vpop.f32.mrb[0].mxu0
      %v426 = vadd.f32 0.0, %v425
      %v427 = vpop.f32.mrb[0].mxu0
      %428 = vmatprep.mubr.bf16.mxu0 0
      %429 = vmatmul.mubr.bf16.gmra.mrb[0].mxu0 %v267
      %v430 = vpop.f32.mrb[0].mxu0
      %v431 = vadd.f32 0.0, %v430
      %v432 = vpop.f32.mrb[0].mxu0
      %v433 = vpop.f32.mrb[0].mxu0
      %v434 = vadd.f32 0.0, %v433
      %v435 = vpop.f32.mrb[0].mxu0
      %436 = vmatprep.mubr.bf16.mxu0 0
      %437 = vmatmul.mubr.bf16.gmra.mrb[0].mxu0 %v268
      %v438 = vpop.f32.mrb[0].mxu0
      %v439 = vadd.f32 0.0, %v438
      %v440 = vpop.f32.mrb[0].mxu0
      %v441 = vpop.f32.mrb[0].mxu0
      %v442 = vadd.f32 0.0, %v441
      %v443 = vpop.f32.mrb[0].mxu0
      %444 = vmatprep.mubr.bf16.mxu0 0
      %445 = vmatmul.mubr.bf16.gmra.mrb[0].mxu0 %v269
      %v446 = vpop.f32.mrb[0].mxu0
      %v447 = vadd.f32 0.0, %v446
      %v448 = vpop.f32.mrb[0].mxu0
      %v449 = vpop.f32.mrb[0].mxu0
      %v450 = vadd.f32 0.0, %v449
      %v451 = vpop.f32.mrb[0].mxu0
      %452 = vmatprep.mubr.bf16.mxu0 0
      %453 = vmatmul.mubr.bf16.gmra.mrb[0].mxu0 %v270
      %v454 = vpop.f32.mrb[0].mxu0
      %v455 = vadd.f32 0.0, %v454
      %v456 = vpop.f32.mrb[0].mxu0
      %v457 = vpop.f32.mrb[0].mxu0
      %v458 = vadd.f32 0.0, %v457
      %v459 = vpop.f32.mrb[0].mxu0
      %460 = vmatprep.mubr.bf16.mxu0 0
      %461 = vmatmul.mubr.bf16.gmra.mrb[0].mxu0 %v271
      %v462 = vpop.f32.mrb[0].mxu0
      %v463 = vadd.f32 0.0, %v462
      %v464 = vpop.f32.mrb[0].mxu0
      %v465 = vpop.f32.mrb[0].mxu0
      %v466 = vadd.f32 0.0, %v465
      %v467 = vpop.f32.mrb[0].mxu0
      %468 = vmatprep.mubr.bf16.mxu0 0
      %469 = vmatmul.mubr.bf16.gmra.mrb[0].mxu0 %v272
      %v470 = vpop.f32.mrb[0].mxu0
      %v471 = vadd.f32 0.0, %v470
      %v472 = vpop.f32.mrb[0].mxu0
      %v473 = vpop.f32.mrb[0].mxu0
      %v474 = vadd.f32 0.0, %v473
      %v475 = vpop.f32.mrb[0].mxu0
      %476 = vmatprep.mubr.bf16.mxu0 0
      %477 = vmatmul.mubr.bf16.gmra.mrb[0].mxu0 %v273
      %v478 = vpop.f32.mrb[0].mxu0
      %v479 = vadd.f32 0.0, %v478
      %v480 = vpop.f32.mrb[0].mxu0
      %v481 = vpop.f32.mrb[0].mxu0
      %v482 = vadd.f32 0.0, %v481
      %v483 = vpop.f32.mrb[0].mxu0
      %484 = vmatprep.mubr.bf16.mxu0 0
      %485 = vmatmul.mubr.bf16.gmra.mrb[0].mxu0 %v274
      %v486 = vpop.f32.mrb[0].mxu0
      %v487 = vadd.f32 0.0, %v486
      %v488 = vpop.f32.mrb[0].mxu0
      %v489 = vpop.f32.mrb[0].mxu0
      %v490 = vadd.f32 0.0, %v489
      %v491 = vpop.f32.mrb[0].mxu0
      %492 = vmatprep.mubr.bf16.mxu0 0
      %493 = vmatmul.mubr.bf16.gmra.mrb[0].mxu0 %v275
      %v494 = vpop.f32.mrb[0].mxu0
      %v495 = vadd.f32 0.0, %v494
      %v496 = vpop.f32.mrb[0].mxu0
      %v497 = vpop.f32.mrb[0].mxu0
      %v498 = vadd.f32 0.0, %v497
      %v499 = vpop.f32.mrb[0].mxu0
      %500 = vdwg.mxu0
      %v501 = vmul.f32 %v375, 0.2
      %v502 = vmul.f32 %v378, 0.2
      %v503 = vmul.f32 %v383, 0.2
      %v504 = vmul.f32 %v386, 0.2
      %v505 = vmul.f32 %v391, 0.2
      %v506 = vmul.f32 %v394, 0.2
      %v507 = vmul.f32 %v399, 0.2
      %v508 = vmul.f32 %v402, 0.2
      %v509 = vmul.f32 %v407, 0.2
      %v510 = vmul.f32 %v410, 0.2
      %v511 = vmul.f32 %v415, 0.2
      %v512 = vmul.f32 %v418, 0.2
      %v513 = vmul.f32 %v423, 0.2
      %v514 = vmul.f32 %v426, 0.2
      %v515 = vmul.f32 %v431, 0.2
      %v516 = vmul.f32 %v434, 0.2
      %v517 = vmul.f32 %v439, 0.2
      %v518 = vmul.f32 %v442, 0.2
      %v519 = vmul.f32 %v447, 0.2
      %v520 = vmul.f32 %v450, 0.2
      %v521 = vmul.f32 %v455, 0.2
      %v522 = vmul.f32 %v458, 0.2
      %v523 = vmul.f32 %v463, 0.2
      %v524 = vmul.f32 %v466, 0.2
      %v525 = vmul.f32 %v471, 0.2
      %v526 = vmul.f32 %v474, 0.2
      %v527 = vmul.f32 %v479, 0.2
      %v528 = vmul.f32 %v482, 0.2
      %v529 = vmul.f32 %v487, 0.2
      %v530 = vmul.f32 %v490, 0.2
      %v531 = vmul.f32 %v495, 0.2
      %v532 = vmul.f32 %v498, 0.2
      %v533 = vmax.f32 %v375, %v501
      %v534 = vmax.f32 %v378, %v502
      %v535 = vmax.f32 %v383, %v503
      %v536 = vmax.f32 %v386, %v504
      %v537 = vmax.f32 %v391, %v505
      %v538 = vmax.f32 %v394, %v506
      %v539 = vmax.f32 %v399, %v507
      %v540 = vmax.f32 %v402, %v508
      %v541 = vmax.f32 %v407, %v509
      %v542 = vmax.f32 %v410, %v510
      %v543 = vmax.f32 %v415, %v511
      %v544 = vmax.f32 %v418, %v512
      %v545 = vmax.f32 %v423, %v513
      %v546 = vmax.f32 %v426, %v514
      %v547 = vmax.f32 %v431, %v515
      %v548 = vmax.f32 %v434, %v516
      %v549 = vmax.f32 %v439, %v517
      %v550 = vmax.f32 %v442, %v518
      %v551 = vmax.f32 %v447, %v519
      %v552 = vmax.f32 %v450, %v520
      %v553 = vmax.f32 %v455, %v521
      %v554 = vmax.f32 %v458, %v522
      %v555 = vmax.f32 %v463, %v523
      %v556 = vmax.f32 %v466, %v524
      %v557 = vmax.f32 %v471, %v525
      %v558 = vmax.f32 %v474, %v526
      %v559 = vmax.f32 %v479, %v527
      %v560 = vmax.f32 %v482, %v528
      %v561 = vmax.f32 %v487, %v529
      %v562 = vmax.f32 %v490, %v530
      %v563 = vmax.f32 %v495, %v531
      %v564 = vmax.f32 %v498, %v532
      %v565 = vpack.c.bf16 %v534, %v533
      %v566 = vpack.c.bf16 %v536, %v535
      %v567 = vpack.c.bf16 %v538, %v537
      %v568 = vpack.c.bf16 %v540, %v539
      %v569 = vpack.c.bf16 %v542, %v541
      %v570 = vpack.c.bf16 %v544, %v543
      %v571 = vpack.c.bf16 %v546, %v545
      %v572 = vpack.c.bf16 %v548, %v547
      %v573 = vpack.c.bf16 %v550, %v549
      %v574 = vpack.c.bf16 %v552, %v551
      %v575 = vpack.c.bf16 %v554, %v553
      %v576 = vpack.c.bf16 %v556, %v555
      %v577 = vpack.c.bf16 %v558, %v557
      %v578 = vpack.c.bf16 %v560, %v559
      %v579 = vpack.c.bf16 %v562, %v561
      %v580 = vpack.c.bf16 %v564, %v563
      %v597 = vunpack.c.l.b16 %v565
      %v598 = vunpack.c.h.b16 %v565
      %v599 = vunpack.c.l.b16 %v566
      %v600 = vunpack.c.h.b16 %v566
      %v601 = vunpack.c.l.b16 %v567
      %v602 = vunpack.c.h.b16 %v567
      %v603 = vunpack.c.l.b16 %v568
      %v604 = vunpack.c.h.b16 %v568
      %v605 = vunpack.c.l.b16 %v569
      %v606 = vunpack.c.h.b16 %v569
      %v607 = vunpack.c.l.b16 %v570
      %v608 = vunpack.c.h.b16 %v570
      %v609 = vunpack.c.l.b16 %v571
      %v610 = vunpack.c.h.b16 %v571
      %v611 = vunpack.c.l.b16 %v572
      %v612 = vunpack.c.h.b16 %v572
      %v613 = vunpack.c.l.b16 %v573
      %v614 = vunpack.c.h.b16 %v573
      %v615 = vunpack.c.l.b16 %v574
      %v616 = vunpack.c.h.b16 %v574
      %v617 = vunpack.c.l.b16 %v575
      %v618 = vunpack.c.h.b16 %v575
      %v619 = vunpack.c.l.b16 %v576
      %v620 = vunpack.c.h.b16 %v576
      %v621 = vunpack.c.l.b16 %v577
      %v622 = vunpack.c.h.b16 %v577
      %v623 = vunpack.c.l.b16 %v578
      %v624 = vunpack.c.h.b16 %v578
      %v625 = vunpack.c.l.b16 %v579
      %v626 = vunpack.c.h.b16 %v579
      %v627 = vunpack.c.l.b16 %v580
      %v628 = vunpack.c.h.b16 %v580
      %v629 = vpack.c.b16 %v597, %v597
      %v630 = vpack.c.b16 %v598, %v598
      %v631 = vpack.c.b16 %v599, %v599
      %v632 = vpack.c.b16 %v600, %v600
      %v633 = vpack.c.b16 %v601, %v601
      %v634 = vpack.c.b16 %v602, %v602
      %v635 = vpack.c.b16 %v603, %v603
      %v636 = vpack.c.b16 %v604, %v604
      %v637 = vpack.c.b16 %v605, %v605
      %v638 = vpack.c.b16 %v606, %v606
      %v639 = vpack.c.b16 %v607, %v607
      %v640 = vpack.c.b16 %v608, %v608
      %v641 = vpack.c.b16 %v609, %v609
      %v642 = vpack.c.b16 %v610, %v610
      %v643 = vpack.c.b16 %v611, %v611
      %v644 = vpack.c.b16 %v612, %v612
      %v645 = vpack.c.b16 %v613, %v613
      %v646 = vpack.c.b16 %v614, %v614
      %v647 = vpack.c.b16 %v615, %v615
      %v648 = vpack.c.b16 %v616, %v616
      %v649 = vpack.c.b16 %v617, %v617
      %v650 = vpack.c.b16 %v618, %v618
      %v651 = vpack.c.b16 %v619, %v619
      %v652 = vpack.c.b16 %v620, %v620
      %v653 = vpack.c.b16 %v621, %v621
      %v654 = vpack.c.b16 %v622, %v622
      %v655 = vpack.c.b16 %v623, %v623
      %v656 = vpack.c.b16 %v624, %v624
      %v657 = vpack.c.b16 %v625, %v625
      %v658 = vpack.c.b16 %v626, %v626
      %v659 = vpack.c.b16 %v627, %v627
      %v660 = vpack.c.b16 %v628, %v628
      %693 = vst [vmem:[%s145] sm:$0xf] %v629
      %694 = vst [vmem:[%s145 + $0x4] sm:$0xf] %v630
      %695 = vst [vmem:[%s145 + $0x8] sm:$0xf] %v631
      %696 = vst [vmem:[%s145 + $0xc] sm:$0xf] %v632
      %697 = vst [vmem:[%s145 + $0x10] sm:$0xf] %v633
      %698 = vst [vmem:[%s145 + $0x14] sm:$0xf] %v634
      %699 = vst [vmem:[%s145 + $0x18] sm:$0xf] %v635
      %700 = vst [vmem:[%s145 + $0x1c] sm:$0xf] %v636
      %701 = vst [vmem:[%s145 + $0x20] sm:$0xf] %v637
      %702 = vst [vmem:[%s145 + $0x24] sm:$0xf] %v638
      %703 = vst [vmem:[%s145 + $0x28] sm:$0xf] %v639
      %704 = vst [vmem:[%s145 + $0x2c] sm:$0xf] %v640
      %705 = vst [vmem:[%s145 + $0x30] sm:$0xf] %v641
      %706 = vst [vmem:[%s145 + $0x34] sm:$0xf] %v642
      %707 = vst [vmem:[%s145 + $0x38] sm:$0xf] %v643
      %708 = vst [vmem:[%s145 + $0x3c] sm:$0xf] %v644
      %709 = vst [vmem:[%s145 + $0x40] sm:$0xf] %v645
      %710 = vst [vmem:[%s145 + $0x44] sm:$0xf] %v646
      %711 = vst [vmem:[%s145 + $0x48] sm:$0xf] %v647
      %712 = vst [vmem:[%s145 + $0x4c] sm:$0xf] %v648
      %713 = vst [vmem:[%s145 + $0x50] sm:$0xf] %v649
      %714 = vst [vmem:[%s145 + $0x54] sm:$0xf] %v650
      %715 = vst [vmem:[%s145 + $0x58] sm:$0xf] %v651
      %716 = vst [vmem:[%s145 + $0x5c] sm:$0xf] %v652
      %717 = vst [vmem:[%s145 + $0x60] sm:$0xf] %v653
      %718 = vst [vmem:[%s145 + $0x64] sm:$0xf] %v654
      %719 = vst [vmem:[%s145 + $0x68] sm:$0xf] %v655
      %720 = vst [vmem:[%s145 + $0x6c] sm:$0xf] %v656
      %721 = vst [vmem:[%s145 + $0x70] sm:$0xf] %v657
      %722 = vst [vmem:[%s145 + $0x74] sm:$0xf] %v658
      %723 = vst [vmem:[%s145 + $0x78] sm:$0xf] %v659
      %724 = vst [vmem:[%s145 + $0x7c] sm:$0xf] %v660
      %s725 = smul.u32 32, %s13
      %p726 = scmp.lt.s32.totalorder %s725, 63
      %s727 = scalar_select %p726, %s725, 63
      %s728 = smul.addr %s727, 4
      %s729 = scalar_lea.vmem %s2, %s728
      // Predicated region
      $region29: #{_lambda_.4} parent=27 // pred_check
        %p730 = pneg %p78
      $region30: #{_lambda_.4} parent=27 // pred_check_branch
        %732 = sbr.rel (%p730) target = $region32
      $region31: #{_lambda_.4} parent=27 // pred_region
        %s733 = smul.u32 32, %s13
      $region32: #{_lambda_.4} parent=27 // pred_fallthru
        _
    $region28: #{_lambda_.4} parent=5 // pred_fallthru
      _
    %p734 = scmp.le.s32.totalorder 2, %s8
    // Predicated region
    $region33: #{_lambda_.4} parent=5 // pred_check
      %p735 = pneg %p734
    $region34: #{_lambda_.4} parent=5 // pred_check_branch
      %737 = sbr.rel (%p735) target = $region36
    $region35: #{_lambda_.4} parent=5 // pred_region
      %s738 = ssub.s32 %s8, 2
      // Predicated region
      $region37: #{_lambda_.4} parent=35 // pred_check
        %p739 = pneg %p84
      $region38: #{_lambda_.4} parent=35 // pred_check_branch
        %741 = sbr.rel (%p739) target = $region40
      $region39: #{_lambda_.4} parent=35 // pred_region
        %s742 = smul.u32 32, %s14
        %p743 = scmp.lt.s32.totalorder %s742, 63
        %s744 = scalar_select %p743, %s742, 63
        %s745 = smul.addr %s744, 4
        %s746 = scalar_lea.vmem %s2, %s745
      $region40: #{_lambda_.4} parent=35 // pred_fallthru
        _
    $region36: #{_lambda_.4} parent=5 // pred_fallthru
      _
  $region6: #{_lambda_.4} parent=0 // loop_footer
    %s12 = sadd.s32 1, %s8
  $region7: #{_lambda_.4} parent=0 // loop_footer_branch
    %7 = sbr.rel target = $region3
  $region8: #{_lambda_.4} parent=0 // loop_exit
    _

// kernel: _lambda_.5
$region0: #{_lambda_.5}
  #allocation0 [shape = 'u32[]', space=smem, size = 0x4, offset = 0x4, fixed_abs, tag = 'smem constant byte address 0x4 - core index']
  #allocation1 [shape = 'u32[144,128]{1,0:T(1,128)}', space=vmem, size = 0x12000, scoped, tag = 'internal scratch']
  #allocation2 [shape = 'f32[1,128,128]{2,1,0:T(8,128)}', space=vmem, size = 0x10000, scoped, tag = 'scratch operand']
  #allocation3 [shape = 'f32[1,128]{1,0:T(1,128)}', space=vmem, size = 0x200, scoped, tag = 'scratch operand']
  #allocation4 [shape = 'f32[1,128]{1,0:T(1,128)}', space=vmem, size = 0x200, scoped, tag = 'scratch operand']
  %s0 = inlined_call_operand.vmem [shape: bf16[128,128], index: 0, kind: input, shape index: {}]
  %s1 = inlined_call_operand.vmem [shape: bf16[128,128], index: 1, kind: input, shape index: {}]
  %s2 = inlined_call_operand.vmem [shape: f32[1,128], index: 2, kind: input, shape index: {}]
  %s3 = inlined_call_operand.vmem [shape: f32[1,128], index: 3, kind: input, shape index: {}]
  %s4 = inlined_call_operand.vmem [shape: bf16[128,128], index: 4, kind: output, shape index: {}]
  %s5 = sld [smem:[#allocation0]]
  $region38: #{_lambda_.5} parent=0
    _
  %s7 = ssub.s32 1, %s5
  %s8 = scalar_select 0, %s7, %s5
  // Predicated region
  $region2: #{_lambda_.5} parent=0 // pred_check
    _
  $region3: #{_lambda_.5} parent=0 // pred_check_branch
    %10 = sbr.rel (0) target = $region5
  $region4: #{_lambda_.5} parent=0 // pred_region
    _
  $region5: #{_lambda_.5} parent=0 // pred_fallthru
    _
  // Predicated region
  $region6: #{_lambda_.5} parent=0 // pred_check
    _
  $region7: #{_lambda_.5} parent=0 // pred_check_branch
    %12 = sbr.rel (0) target = $region9
  $region8: #{_lambda_.5} parent=0 // pred_region
    _
  $region9: #{_lambda_.5} parent=0 // pred_fallthru
    _
  // Predicated region
  $region10: #{_lambda_.5} parent=0 // pred_check
    _
  $region11: #{_lambda_.5} parent=0 // pred_check_branch
    %14 = sbr.rel (0) target = $region13
  $region12: #{_lambda_.5} parent=0 // pred_region
    _
  $region13: #{_lambda_.5} parent=0 // pred_fallthru
    _
  // Predicated region
  $region14: #{_lambda_.5} parent=0 // pred_check
    _
  $region15: #{_lambda_.5} parent=0 // pred_check_branch
    %16 = sbr.rel (0) target = $region17
  $region16: #{_lambda_.5} parent=0 // pred_region
    _
  $region17: #{_lambda_.5} parent=0 // pred_fallthru
    _
  %v18 = vld [vmem:[%s0] sm:$0xf]
  %v19 = vld [vmem:[%s0 + $0x4] sm:$0xf]
  %v20 = vld [vmem:[%s0 + $0x8] sm:$0xf]
  %v21 = vld [vmem:[%s0 + $0xc] sm:$0xf]
  %v22 = vld [vmem:[%s0 + $0x10] sm:$0xf]
  %v23 = vld [vmem:[%s0 + $0x14] sm:$0xf]
  %v24 = vld [vmem:[%s0 + $0x18] sm:$0xf]
  %v25 = vld [vmem:[%s0 + $0x1c] sm:$0xf]
  %v26 = vld [vmem:[%s0 + $0x20] sm:$0xf]
  %v27 = vld [vmem:[%s0 + $0x24] sm:$0xf]
  %v28 = vld [vmem:[%s0 + $0x28] sm:$0xf]
  %v29 = vld [vmem:[%s0 + $0x2c] sm:$0xf]
  %v30 = vld [vmem:[%s0 + $0x30] sm:$0xf]
  %v31 = vld [vmem:[%s0 + $0x34] sm:$0xf]
  %v32 = vld [vmem:[%s0 + $0x38] sm:$0xf]
  %v33 = vld [vmem:[%s0 + $0x3c] sm:$0xf]
  %v34 = vld [vmem:[%s1] sm:$0xf]
  %v35 = vld [vmem:[%s1 + $0x4] sm:$0xf]
  %v36 = vld [vmem:[%s1 + $0x8] sm:$0xf]
  %v37 = vld [vmem:[%s1 + $0xc] sm:$0xf]
  %v38 = vld [vmem:[%s1 + $0x10] sm:$0xf]
  %v39 = vld [vmem:[%s1 + $0x14] sm:$0xf]
  %v40 = vld [vmem:[%s1 + $0x18] sm:$0xf]
  %v41 = vld [vmem:[%s1 + $0x1c] sm:$0xf]
  %v42 = vld [vmem:[%s1 + $0x20] sm:$0xf]
  %v43 = vld [vmem:[%s1 + $0x24] sm:$0xf]
  %v44 = vld [vmem:[%s1 + $0x28] sm:$0xf]
  %v45 = vld [vmem:[%s1 + $0x2c] sm:$0xf]
  %v46 = vld [vmem:[%s1 + $0x30] sm:$0xf]
  %v47 = vld [vmem:[%s1 + $0x34] sm:$0xf]
  %v48 = vld [vmem:[%s1 + $0x38] sm:$0xf]
  %v49 = vld [vmem:[%s1 + $0x3c] sm:$0xf]
  %v66 = vunpack.c.l.b16 %v18
  %v67 = vunpack.c.l.b16 %v19
  %v68 = vunpack.c.l.b16 %v20
  %v69 = vunpack.c.l.b16 %v21
  %v70 = vunpack.c.l.b16 %v22
  %v71 = vunpack.c.l.b16 %v23
  %v72 = vunpack.c.l.b16 %v24
  %v73 = vunpack.c.l.b16 %v25
  %v74 = vunpack.c.l.b16 %v26
  %v75 = vunpack.c.l.b16 %v27
  %v76 = vunpack.c.l.b16 %v28
  %v77 = vunpack.c.l.b16 %v29
  %v78 = vunpack.c.l.b16 %v30
  %v79 = vunpack.c.l.b16 %v31
  %v80 = vunpack.c.l.b16 %v32
  %v81 = vunpack.c.l.b16 %v33
  %v82 = vpack.c.b16 %v67, %v66
  %v83 = vpack.c.b16 %v69, %v68
  %v84 = vpack.c.b16 %v71, %v70
  %v85 = vpack.c.b16 %v73, %v72
  %v86 = vpack.c.b16 %v75, %v74
  %v87 = vpack.c.b16 %v77, %v76
  %v88 = vpack.c.b16 %v79, %v78
  %v89 = vpack.c.b16 %v81, %v80
  %v114 = vunpack.c.l.b16 %v34
  %v115 = vunpack.c.l.b16 %v35
  %v116 = vunpack.c.l.b16 %v36
  %v117 = vunpack.c.l.b16 %v37
  %v118 = vunpack.c.l.b16 %v38
  %v119 = vunpack.c.l.b16 %v39
  %v120 = vunpack.c.l.b16 %v40
  %v121 = vunpack.c.l.b16 %v41
  %v122 = vunpack.c.l.b16 %v42
  %v123 = vunpack.c.l.b16 %v43
  %v124 = vunpack.c.l.b16 %v44
  %v125 = vunpack.c.l.b16 %v45
  %v126 = vunpack.c.l.b16 %v46
  %v127 = vunpack.c.l.b16 %v47
  %v128 = vunpack.c.l.b16 %v48
  %v129 = vunpack.c.l.b16 %v49
  %v130 = vpack.c.b16 %v115, %v114
  %v131 = vpack.c.b16 %v117, %v116
  %v132 = vpack.c.b16 %v119, %v118
  %v133 = vpack.c.b16 %v121, %v120
  %v134 = vpack.c.b16 %v123, %v122
  %v135 = vpack.c.b16 %v125, %v124
  %v136 = vpack.c.b16 %v127, %v126
  %v137 = vpack.c.b16 %v129, %v128
  %146 = vmatprep.subr.bf16.mxu0 0
  %147 = vmatpush1.bf16.msra.mxu0 %v130
  %148 = vmatprep.subr.bf16.mxu0 0
  %149 = vmatpush1.bf16.msra.mxu0 %v131
  %150 = vmatprep.subr.bf16.mxu0 0
  %151 = vmatpush1.bf16.msra.mxu0 %v132
  %152 = vmatprep.subr.bf16.mxu0 0
  %153 = vmatpush1.bf16.msra.mxu0 %v133
  %154 = vmatprep.subr.bf16.mxu0 0
  %155 = vmatpush1.bf16.msra.mxu0 %v134
  %156 = vmatprep.subr.bf16.mxu0 0
  %157 = vmatpush1.bf16.msra.mxu0 %v135
  %158 = vmatprep.subr.bf16.mxu0 0
  %159 = vmatpush1.bf16.msra.mxu0 %v136
  %160 = vmatprep.subr.bf16.mxu0 0
  %161 = vmatpush1.bf16.msra.mxu0 %v137
  %162 = vmatprep.subr.bf16.mxu0 0
  %163 = vmatpush1.bf16.msra.mxu0 0
  %164 = vmatprep.subr.bf16.mxu0 0
  %165 = vmatpush1.bf16.msra.mxu0 0
  %166 = vmatprep.subr.bf16.mxu0 0
  %167 = vmatpush1.bf16.msra.mxu0 0
  %168 = vmatprep.subr.bf16.mxu0 0
  %169 = vmatpush1.bf16.msra.mxu0 0
  %170 = vmatprep.subr.bf16.mxu0 0
  %171 = vmatpush1.bf16.msra.mxu0 0
  %172 = vmatprep.subr.bf16.mxu0 0
  %173 = vmatpush1.bf16.msra.mxu0 0
  %174 = vmatprep.subr.bf16.mxu0 0
  %175 = vmatpush1.bf16.msra.mxu0 0
  %176 = vmatprep.subr.bf16.mxu0 0
  %177 = vmatpush1.bf16.msra.mxu0 0
  %178 = vmatprep.mubr.bf16.mxu0 0
  %179 = vmatmul.mubr.bf16.gmra.mrb[0].mxu0 %v82
  %v180 = vpop.f32.mrb[0].mxu0
  %v181 = vadd.f32 0.0, %v180
  %v182 = vpop.f32.mrb[0].mxu0
  %v183 = vpop.f32.mrb[0].mxu0
  %v184 = vadd.f32 0.0, %v183
  %v185 = vpop.f32.mrb[0].mxu0
  %186 = vmatprep.mubr.bf16.mxu0 0
  %187 = vmatmul.mubr.bf16.gmra.mrb[0].mxu0 %v83
  %v188 = vpop.f32.mrb[0].mxu0
  %v189 = vadd.f32 0.0, %v188
  %v190 = vpop.f32.mrb[0].mxu0
  %v191 = vpop.f32.mrb[0].mxu0
  %v192 = vadd.f32 0.0, %v191
  %v193 = vpop.f32.mrb[0].mxu0
  %194 = vmatprep.mubr.bf16.mxu0 0
  %195 = vmatmul.mubr.bf16.gmra.mrb[0].mxu0 %v84
  %v196 = vpop.f32.mrb[0].mxu0
  %v197 = vadd.f32 0.0, %v196
  %v198 = vpop.f32.mrb[0].mxu0
  %v199 = vpop.f32.mrb[0].mxu0
  %v200 = vadd.f32 0.0, %v199
  %v201 = vpop.f32.mrb[0].mxu0
  %202 = vmatprep.mubr.bf16.mxu0 0
  %203 = vmatmul.mubr.bf16.gmra.mrb[0].mxu0 %v85
  %v204 = vpop.f32.mrb[0].mxu0
  %v205 = vadd.f32 0.0, %v204
  %v206 = vpop.f32.mrb[0].mxu0
  %v207 = vpop.f32.mrb[0].mxu0
  %v208 = vadd.f32 0.0, %v207
  %v209 = vpop.f32.mrb[0].mxu0
  %210 = vmatprep.mubr.bf16.mxu0 0
  %211 = vmatmul.mubr.bf16.gmra.mrb[0].mxu0 %v86
  %v212 = vpop.f32.mrb[0].mxu0
  %v213 = vadd.f32 0.0, %v212
  %v214 = vpop.f32.mrb[0].mxu0
  %v215 = vpop.f32.mrb[0].mxu0
  %v216 = vadd.f32 0.0, %v215
  %v217 = vpop.f32.mrb[0].mxu0
  %218 = vmatprep.mubr.bf16.mxu0 0
  %219 = vmatmul.mubr.bf16.gmra.mrb[0].mxu0 %v87
  %v220 = vpop.f32.mrb[0].mxu0
  %v221 = vadd.f32 0.0, %v220
  %v222 = vpop.f32.mrb[0].mxu0
  %v223 = vpop.f32.mrb[0].mxu0
  %v224 = vadd.f32 0.0, %v223
  %v225 = vpop.f32.mrb[0].mxu0
  %226 = vmatprep.mubr.bf16.mxu0 0
  %227 = vmatmul.mubr.bf16.gmra.mrb[0].mxu0 %v88
  %v228 = vpop.f32.mrb[0].mxu0
  %v229 = vadd.f32 0.0, %v228
  %v230 = vpop.f32.mrb[0].mxu0
  %v231 = vpop.f32.mrb[0].mxu0
  %v232 = vadd.f32 0.0, %v231
  %v233 = vpop.f32.mrb[0].mxu0
  %234 = vmatprep.mubr.bf16.mxu0 0
  %235 = vmatmul.mubr.bf16.gmra.mrb[0].mxu0 %v89
  %v236 = vpop.f32.mrb[0].mxu0
  %v237 = vadd.f32 0.0, %v236
  %v238 = vpop.f32.mrb[0].mxu0
  %v239 = vpop.f32.mrb[0].mxu0
  %v240 = vadd.f32 0.0, %v239
  %v241 = vpop.f32.mrb[0].mxu0
  %242 = vdwg.mxu0
  %s243 = smul.u32 0, 128
  %s244 = scalar_lea.vmem [#allocation2], %s243
  %245 = vst [vmem:[%s244] sm:$0xff] %v181
  %246 = vst [vmem:[%s244 + $0x8] sm:$0xff] %v184
  %247 = vst [vmem:[%s244 + $0x10] sm:$0xff] %v189
  %248 = vst [vmem:[%s244 + $0x18] sm:$0xff] %v192
  %249 = vst [vmem:[%s244 + $0x20] sm:$0xff] %v197
  %250 = vst [vmem:[%s244 + $0x28] sm:$0xff] %v200
  %251 = vst [vmem:[%s244 + $0x30] sm:$0xff] %v205
  %252 = vst [vmem:[%s244 + $0x38] sm:$0xff] %v208
  %253 = vst [vmem:[%s244 + $0x40] sm:$0xff] %v213
  %254 = vst [vmem:[%s244 + $0x48] sm:$0xff] %v216
  %255 = vst [vmem:[%s244 + $0x50] sm:$0xff] %v221
  %256 = vst [vmem:[%s244 + $0x58] sm:$0xff] %v224
  %257 = vst [vmem:[%s244 + $0x60] sm:$0xff] %v229
  %258 = vst [vmem:[%s244 + $0x68] sm:$0xff] %v232
  %259 = vst [vmem:[%s244 + $0x70] sm:$0xff] %v237
  %260 = vst [vmem:[%s244 + $0x78] sm:$0xff] %v240
  %v261 = vadd.f32 %v181, %v184
  %v262 = vadd.f32 %v261, %v189
  %v263 = vadd.f32 %v262, %v192
  %v264 = vadd.f32 %v263, %v197
  %v265 = vadd.f32 %v264, %v200
  %v266 = vadd.f32 %v265, %v205
  %v267 = vadd.f32 %v266, %v208
  %v268 = vadd.f32 %v267, %v213
  %v269 = vadd.f32 %v268, %v216
  %v270 = vadd.f32 %v269, %v221
  %v271 = vadd.f32 %v270, %v224
  %v272 = vadd.f32 %v271, %v229
  %v273 = vadd.f32 %v272, %v232
  %v274 = vadd.f32 %v273, %v237
  %v275 = vadd.f32 %v274, %v240
  %v276 = vrot.slane %v275, 4
  %v277 = vadd.f32 %v275, %v276
  %v278 = vrot.slane %v277, 2
  %v279 = vadd.f32 %v277, %v278
  %v280 = vrot.slane %v279, 1
  %v281 = vadd.f32 %v279, %v280
  %v282 = vmul.f32 %v181, %v181
  %v283 = vmul.f32 %v184, %v184
  %v284 = vmul.f32 %v189, %v189
  %v285 = vmul.f32 %v192, %v192
  %v286 = vmul.f32 %v197, %v197
  %v287 = vmul.f32 %v200, %v200
  %v288 = vmul.f32 %v205, %v205
  %v289 = vmul.f32 %v208, %v208
  %v290 = vmul.f32 %v213, %v213
  %v291 = vmul.f32 %v216, %v216
  %v292 = vmul.f32 %v221, %v221
  %v293 = vmul.f32 %v224, %v224
  %v294 = vmul.f32 %v229, %v229
  %v295 = vmul.f32 %v232, %v232
  %v296 = vmul.f32 %v237, %v237
  %v297 = vmul.f32 %v240, %v240
  %v298 = vadd.f32 %v282, %v283
  %v299 = vadd.f32 %v298, %v284
  %v300 = vadd.f32 %v299, %v285
  %v301 = vadd.f32 %v300, %v286
  %v302 = vadd.f32 %v301, %v287
  %v303 = vadd.f32 %v302, %v288
  %v304 = vadd.f32 %v303, %v289
  %v305 = vadd.f32 %v304, %v290
  %v306 = vadd.f32 %v305, %v291
  %v307 = vadd.f32 %v306, %v292
  %v308 = vadd.f32 %v307, %v293
  %v309 = vadd.f32 %v308, %v294
  %v310 = vadd.f32 %v309, %v295
  %v311 = vadd.f32 %v310, %v296
  %v312 = vadd.f32 %v311, %v297
  %v313 = vrot.slane %v312, 4
  %v314 = vadd.f32 %v312, %v313
  %v315 = vrot.slane %v314, 2
  %v316 = vadd.f32 %v314, %v315
  %v317 = vrot.slane %v316, 1
  %v318 = vadd.f32 %v316, %v317
  %p319 = scmp.eq.s32.totalorder 0, 0
  // Predicated region
  $region18: #{_lambda_.5} parent=0 // pred_check
    %p320 = pneg %p319
  $region19: #{_lambda_.5} parent=0 // pred_check_branch
    %322 = sbr.rel (%p320) target = $region21
  $region20: #{_lambda_.5} parent=0 // pred_region
    %323 = vst [vmem:[#allocation3] sm:$0x1] %v281
    %324 = vst [vmem:[#allocation4] sm:$0x1] %v318
  $region21: #{_lambda_.5} parent=0 // pred_fallthru
    _
  %p325 = scmp.gt.s32.totalorder 0, 0
  // Predicated region
  $region22: #{_lambda_.5} parent=0 // pred_check
    %p326 = pneg %p325
  $region23: #{_lambda_.5} parent=0 // pred_check_branch
    %328 = sbr.rel (%p326) target = $region25
  $region24: #{_lambda_.5} parent=0 // pred_region
    %v329 = vld [vmem:[#allocation3] sm:$0x1]
    %v330 = vadd.f32 %v329, %v281
    %331 = vst [vmem:[#allocation3] sm:$0x1] %v330
    %v332 = vld [vmem:[#allocation4] sm:$0x1]
    %v333 = vadd.f32 %v332, %v318
    %334 = vst [vmem:[#allocation4] sm:$0x1] %v333
  $region25: #{_lambda_.5} parent=0 // pred_fallthru
    _
  // Predicated region
  $region26: #{_lambda_.5} parent=0 // pred_check
    %p335 = pneg %p319
  $region27: #{_lambda_.5} parent=0 // pred_check_branch
    %337 = sbr.rel (%p335) target = $region29
  $region28: #{_lambda_.5} parent=0 // pred_region
    %v338 = vld [vmem:[#allocation3] sm:$0x1]
    %v339 = vmul.f32 %v338, 0.0078125
    %v340 = vld [vmem:[#allocation4] sm:$0x1]
    %v341 = vmul.f32 %v340, 0.0078125
    %v342 = vmul.f32 %v339, %v339
    %v343 = vsub.f32 %v341, %v342
    %v344 = vmax.f32 %v343, 0.0
    %v345 = vadd.f32 %v344, 1e-05
    %v346 = vrsqrt.pop %v345
    %v347 = vld [vmem:[%s2] sm:$0x1]
    %v348 = vmul.f32 %v347, %v346
    %v349 = vld [vmem:[%s3] sm:$0x1]
    %v350 = vmul.f32 %v339, %v348
    %v351 = vsub.f32 %v349, %v350
    %v352 = vld [vmem:[#allocation2] sm:$0xff]
    %v353 = vld [vmem:[#allocation2 + $0x8] sm:$0xff]
    %v354 = vld [vmem:[#allocation2 + $0x10] sm:$0xff]
    %v355 = vld [vmem:[#allocation2 + $0x18] sm:$0xff]
    %v356 = vld [vmem:[#allocation2 + $0x20] sm:$0xff]
    %v357 = vld [vmem:[#allocation2 + $0x28] sm:$0xff]
    %v358 = vld [vmem:[#allocation2 + $0x30] sm:$0xff]
    %v359 = vld [vmem:[#allocation2 + $0x38] sm:$0xff]
    %v360 = vld [vmem:[#allocation2 + $0x40] sm:$0xff]
    %v361 = vld [vmem:[#allocation2 + $0x48] sm:$0xff]
    %v362 = vld [vmem:[#allocation2 + $0x50] sm:$0xff]
    %v363 = vld [vmem:[#allocation2 + $0x58] sm:$0xff]
    %v364 = vld [vmem:[#allocation2 + $0x60] sm:$0xff]
    %v365 = vld [vmem:[#allocation2 + $0x68] sm:$0xff]
    %v366 = vld [vmem:[#allocation2 + $0x70] sm:$0xff]
    %v367 = vld [vmem:[#allocation2 + $0x78] sm:$0xff]
    %v369 = vlaneseq
    %v370 = vshrl.u32 %v369, 7
    %v371 = vsub.s32 0, %v370
    %v372 = vrot.slane %v348, %v371
    %v374 = vmul.f32 %v352, %v372
    %v375 = vmul.f32 %v353, %v372
    %v376 = vmul.f32 %v354, %v372
    %v377 = vmul.f32 %v355, %v372
    %v378 = vmul.f32 %v356, %v372
    %v379 = vmul.f32 %v357, %v372
    %v380 = vmul.f32 %v358, %v372
    %v381 = vmul.f32 %v359, %v372
    %v382 = vmul.f32 %v360, %v372
    %v383 = vmul.f32 %v361, %v372
    %v384 = vmul.f32 %v362, %v372
    %v385 = vmul.f32 %v363, %v372
    %v386 = vmul.f32 %v364, %v372
    %v387 = vmul.f32 %v365, %v372
    %v388 = vmul.f32 %v366, %v372
    %v389 = vmul.f32 %v367, %v372
    %v391 = vlaneseq
    %v392 = vshrl.u32 %v391, 7
    %v393 = vsub.s32 0, %v392
    %v394 = vrot.slane %v351, %v393
    %v396 = vadd.f32 %v374, %v394
    %v397 = vadd.f32 %v375, %v394
    %v398 = vadd.f32 %v376, %v394
    %v399 = vadd.f32 %v377, %v394
    %v400 = vadd.f32 %v378, %v394
    %v401 = vadd.f32 %v379, %v394
    %v402 = vadd.f32 %v380, %v394
    %v403 = vadd.f32 %v381, %v394
    %v404 = vadd.f32 %v382, %v394
    %v405 = vadd.f32 %v383, %v394
    %v406 = vadd.f32 %v384, %v394
    %v407 = vadd.f32 %v385, %v394
    %v408 = vadd.f32 %v386, %v394
    %v409 = vadd.f32 %v387, %v394
    %v410 = vadd.f32 %v388, %v394
    %v411 = vadd.f32 %v389, %v394
    %v412 = vmul.f32 %v396, 0.2
    %v413 = vmul.f32 %v397, 0.2
    %v414 = vmul.f32 %v398, 0.2
    %v415 = vmul.f32 %v399, 0.2
    %v416 = vmul.f32 %v400, 0.2
    %v417 = vmul.f32 %v401, 0.2
    %v418 = vmul.f32 %v402, 0.2
    %v419 = vmul.f32 %v403, 0.2
    %v420 = vmul.f32 %v404, 0.2
    %v421 = vmul.f32 %v405, 0.2
    %v422 = vmul.f32 %v406, 0.2
    %v423 = vmul.f32 %v407, 0.2
    %v424 = vmul.f32 %v408, 0.2
    %v425 = vmul.f32 %v409, 0.2
    %v426 = vmul.f32 %v410, 0.2
    %v427 = vmul.f32 %v411, 0.2
    %v428 = vmax.f32 %v396, %v412
    %v429 = vmax.f32 %v397, %v413
    %v430 = vmax.f32 %v398, %v414
    %v431 = vmax.f32 %v399, %v415
    %v432 = vmax.f32 %v400, %v416
    %v433 = vmax.f32 %v401, %v417
    %v434 = vmax.f32 %v402, %v418
    %v435 = vmax.f32 %v403, %v419
    %v436 = vmax.f32 %v404, %v420
    %v437 = vmax.f32 %v405, %v421
    %v438 = vmax.f32 %v406, %v422
    %v439 = vmax.f32 %v407, %v423
    %v440 = vmax.f32 %v408, %v424
    %v441 = vmax.f32 %v409, %v425
    %v442 = vmax.f32 %v410, %v426
    %v443 = vmax.f32 %v411, %v427
    %v444 = vpack.c.bf16 %v429, %v428
    %v445 = vpack.c.bf16 %v431, %v430
    %v446 = vpack.c.bf16 %v433, %v432
    %v447 = vpack.c.bf16 %v435, %v434
    %v448 = vpack.c.bf16 %v437, %v436
    %v449 = vpack.c.bf16 %v439, %v438
    %v450 = vpack.c.bf16 %v441, %v440
    %v451 = vpack.c.bf16 %v443, %v442
    %v460 = vunpack.c.l.b16 %v444
    %v461 = vunpack.c.h.b16 %v444
    %v462 = vunpack.c.l.b16 %v445
    %v463 = vunpack.c.h.b16 %v445
    %v464 = vunpack.c.l.b16 %v446
    %v465 = vunpack.c.h.b16 %v446
    %v466 = vunpack.c.l.b16 %v447
    %v467 = vunpack.c.h.b16 %v447
    %v468 = vunpack.c.l.b16 %v448
    %v469 = vunpack.c.h.b16 %v448
    %v470 = vunpack.c.l.b16 %v449
    %v471 = vunpack.c.h.b16 %v449
    %v472 = vunpack.c.l.b16 %v450
    %v473 = vunpack.c.h.b16 %v450
    %v474 = vunpack.c.l.b16 %v451
    %v475 = vunpack.c.h.b16 %v451
    %v476 = vpack.c.b16 %v460, %v460
    %v477 = vpack.c.b16 %v461, %v461
    %v478 = vpack.c.b16 %v462, %v462
    %v479 = vpack.c.b16 %v463, %v463
    %v480 = vpack.c.b16 %v464, %v464
    %v481 = vpack.c.b16 %v465, %v465
    %v482 = vpack.c.b16 %v466, %v466
    %v483 = vpack.c.b16 %v467, %v467
    %v484 = vpack.c.b16 %v468, %v468
    %v485 = vpack.c.b16 %v469, %v469
    %v486 = vpack.c.b16 %v470, %v470
    %v487 = vpack.c.b16 %v471, %v471
    %v488 = vpack.c.b16 %v472, %v472
    %v489 = vpack.c.b16 %v473, %v473
    %v490 = vpack.c.b16 %v474, %v474
    %v491 = vpack.c.b16 %v475, %v475
    %508 = vst [vmem:[%s4] sm:$0xf] %v476
    %509 = vst [vmem:[%s4 + $0x4] sm:$0xf] %v477
    %510 = vst [vmem:[%s4 + $0x8] sm:$0xf] %v478
    %511 = vst [vmem:[%s4 + $0xc] sm:$0xf] %v479
    %512 = vst [vmem:[%s4 + $0x10] sm:$0xf] %v480
    %513 = vst [vmem:[%s4 + $0x14] sm:$0xf] %v481
    %514 = vst [vmem:[%s4 + $0x18] sm:$0xf] %v482
    %515 = vst [vmem:[%s4 + $0x1c] sm:$0xf] %v483
    %516 = vst [vmem:[%s4 + $0x20] sm:$0xf] %v484
    %517 = vst [vmem:[%s4 + $0x24] sm:$0xf] %v485
    %518 = vst [vmem:[%s4 + $0x28] sm:$0xf] %v486
    %519 = vst [vmem:[%s4 + $0x2c] sm:$0xf] %v487
    %520 = vst [vmem:[%s4 + $0x30] sm:$0xf] %v488
    %521 = vst [vmem:[%s4 + $0x34] sm:$0xf] %v489
    %522 = vst [vmem:[%s4 + $0x38] sm:$0xf] %v490
    %523 = vst [vmem:[%s4 + $0x3c] sm:$0xf] %v491
  $region29: #{_lambda_.5} parent=0 // pred_fallthru
    _
  // Predicated region
  $region30: #{_lambda_.5} parent=0 // pred_check
    _
  $region31: #{_lambda_.5} parent=0 // pred_check_branch
    %525 = sbr.rel (0) target = $region33
  $region32: #{_lambda_.5} parent=0 // pred_region
    _
  $region33: #{_lambda_.5} parent=0 // pred_fallthru
    _
  // Predicated region
  $region34: #{_lambda_.5} parent=0 // pred_check
    _
  $region35: #{_lambda_.5} parent=0 // pred_check_branch
    %527 = sbr.rel (0) target = $region37
  $region36: #{_lambda_.5} parent=0 // pred_region
    _
  $region37: #{_lambda_.5} parent=0 // pred_fallthru
    _

// kernel: _lambda_.6
$region0: #{_lambda_.6}
  #allocation0 [shape = 'u32[]', space=smem, size = 0x4, offset = 0x4, fixed_abs, tag = 'smem constant byte address 0x4 - core index']
  #allocation1 [shape = 'u32[144,128]{1,0:T(1,128)}', space=vmem, size = 0x12000, scoped, tag = 'internal scratch']
  #allocation2 [shape = 'f32[1,32,128]{2,1,0:T(8,128)}', space=vmem, size = 0x4000, scoped, tag = 'scratch operand']
  #allocation3 [shape = 'f32[1,128]{1,0:T(1,128)}', space=vmem, size = 0x200, scoped, tag = 'scratch operand']
  #allocation4 [shape = 'f32[1,128]{1,0:T(1,128)}', space=vmem, size = 0x200, scoped, tag = 'scratch operand']
  %s0 = inlined_call_operand.vmem [shape: bf16[32,256], index: 0, kind: input, shape index: {}]
  %s1 = inlined_call_operand.vmem [shape: bf16[256,128], index: 1, kind: input, shape index: {}]
  %s2 = inlined_call_operand.vmem [shape: f32[1,128], index: 2, kind: input, shape index: {}]
  %s3 = inlined_call_operand.vmem [shape: f32[1,128], index: 3, kind: input, shape index: {}]
  %s4 = inlined_call_operand.vmem [shape: bf16[32,128], index: 4, kind: output, shape index: {}]
  %s5 = sld [smem:[#allocation0]]
  $region38: #{_lambda_.6} parent=0
    _
  %s7 = ssub.s32 1, %s5
  %s8 = scalar_select 0, %s7, %s5
  // Predicated region
  $region2: #{_lambda_.6} parent=0 // pred_check
    _
  $region3: #{_lambda_.6} parent=0 // pred_check_branch
    %10 = sbr.rel (0) target = $region5
  $region4: #{_lambda_.6} parent=0 // pred_region
    _
  $region5: #{_lambda_.6} parent=0 // pred_fallthru
    _
  // Predicated region
  $region6: #{_lambda_.6} parent=0 // pred_check
    _
  $region7: #{_lambda_.6} parent=0 // pred_check_branch
    %12 = sbr.rel (0) target = $region9
  $region8: #{_lambda_.6} parent=0 // pred_region
    _
  $region9: #{_lambda_.6} parent=0 // pred_fallthru
    _
  // Predicated region
  $region10: #{_lambda_.6} parent=0 // pred_check
    _
  $region11: #{_lambda_.6} parent=0 // pred_check_branch
    %14 = sbr.rel (0) target = $region13
  $region12: #{_lambda_.6} parent=0 // pred_region
    _
  $region13: #{_lambda_.6} parent=0 // pred_fallthru
    _
  // Predicated region
  $region14: #{_lambda_.6} parent=0 // pred_check
    _
  $region15: #{_lambda_.6} parent=0 // pred_check_branch
    %16 = sbr.rel (0) target = $region17
  $region16: #{_lambda_.6} parent=0 // pred_region
    _
  $region17: #{_lambda_.6} parent=0 // pred_fallthru
    _
  %v18 = vld [vmem:[%s0] sm:$0xff]
  %v19 = vld [vmem:[%s0 + $0x8] sm:$0xff]
  %v20 = vld [vmem:[%s0 + $0x10] sm:$0xff]
  %v21 = vld [vmem:[%s0 + $0x18] sm:$0xff]
  %v22 = vld [vmem:[%s1] sm:$0xf]
  %v23 = vld [vmem:[%s1 + $0x4] sm:$0xf]
  %v24 = vld [vmem:[%s1 + $0x8] sm:$0xf]
  %v25 = vld [vmem:[%s1 + $0xc] sm:$0xf]
  %v26 = vld [vmem:[%s1 + $0x10] sm:$0xf]
  %v27 = vld [vmem:[%s1 + $0x14] sm:$0xf]
  %v28 = vld [vmem:[%s1 + $0x18] sm:$0xf]
  %v29 = vld [vmem:[%s1 + $0x1c] sm:$0xf]
  %v30 = vld [vmem:[%s1 + $0x20] sm:$0xf]
  %v31 = vld [vmem:[%s1 + $0x24] sm:$0xf]
  %v32 = vld [vmem:[%s1 + $0x28] sm:$0xf]
  %v33 = vld [vmem:[%s1 + $0x2c] sm:$0xf]
  %v34 = vld [vmem:[%s1 + $0x30] sm:$0xf]
  %v35 = vld [vmem:[%s1 + $0x34] sm:$0xf]
  %v36 = vld [vmem:[%s1 + $0x38] sm:$0xf]
  %v37 = vld [vmem:[%s1 + $0x3c] sm:$0xf]
  %v38 = vld [vmem:[%s1 + $0x40] sm:$0xf]
  %v39 = vld [vmem:[%s1 + $0x44] sm:$0xf]
  %v40 = vld [vmem:[%s1 + $0x48] sm:$0xf]
  %v41 = vld [vmem:[%s1 + $0x4c] sm:$0xf]
  %v42 = vld [vmem:[%s1 + $0x50] sm:$0xf]
  %v43 = vld [vmem:[%s1 + $0x54] sm:$0xf]
  %v44 = vld [vmem:[%s1 + $0x58] sm:$0xf]
  %v45 = vld [vmem:[%s1 + $0x5c] sm:$0xf]
  %v46 = vld [vmem:[%s1 + $0x60] sm:$0xf]
  %v47 = vld [vmem:[%s1 + $0x64] sm:$0xf]
  %v48 = vld [vmem:[%s1 + $0x68] sm:$0xf]
  %v49 = vld [vmem:[%s1 + $0x6c] sm:$0xf]
  %v50 = vld [vmem:[%s1 + $0x70] sm:$0xf]
  %v51 = vld [vmem:[%s1 + $0x74] sm:$0xf]
  %v52 = vld [vmem:[%s1 + $0x78] sm:$0xf]
  %v53 = vld [vmem:[%s1 + $0x7c] sm:$0xf]
  %v58 = vunpack.c.l.b16 %v18
  %v59 = vunpack.c.h.b16 %v18
  %v60 = vunpack.c.l.b16 %v19
  %v61 = vunpack.c.h.b16 %v19
  %v62 = vunpack.c.l.b16 %v20
  %v63 = vunpack.c.h.b16 %v20
  %v64 = vunpack.c.l.b16 %v21
  %v65 = vunpack.c.h.b16 %v21
  %v66 = vpack.c.b16 %v60, %v58
  %v67 = vpack.c.b16 %v61, %v59
  %v68 = vpack.c.b16 %v64, %v62
  %v69 = vpack.c.b16 %v65, %v63
  %v106 = vunpack.c.l.b16 %v22
  %v107 = vunpack.c.l.b16 %v23
  %v108 = vunpack.c.l.b16 %v24
  %v109 = vunpack.c.l.b16 %v25
  %v110 = vunpack.c.l.b16 %v26
  %v111 = vunpack.c.l.b16 %v27
  %v112 = vunpack.c.l.b16 %v28
  %v113 = vunpack.c.l.b16 %v29
  %v114 = vunpack.c.l.b16 %v30
  %v115 = vunpack.c.l.b16 %v31
  %v116 = vunpack.c.l.b16 %v32
  %v117 = vunpack.c.l.b16 %v33
  %v118 = vunpack.c.l.b16 %v34
  %v119 = vunpack.c.l.b16 %v35
  %v120 = vunpack.c.l.b16 %v36
  %v121 = vunpack.c.l.b16 %v37
  %v122 = vunpack.c.l.b16 %v38
  %v123 = vunpack.c.l.b16 %v39
  %v124 = vunpack.c.l.b16 %v40
  %v125 = vunpack.c.l.b16 %v41
  %v126 = vunpack.c.l.b16 %v42
  %v127 = vunpack.c.l.b16 %v43
  %v128 = vunpack.c.l.b16 %v44
  %v129 = vunpack.c.l.b16 %v45
  %v130 = vunpack.c.l.b16 %v46
  %v131 = vunpack.c.l.b16 %v47
  %v132 = vunpack.c.l.b16 %v48
  %v133 = vunpack.c.l.b16 %v49
  %v134 = vunpack.c.l.b16 %v50
  %v135 = vunpack.c.l.b16 %v51
  %v136 = vunpack.c.l.b16 %v52
  %v137 = vunpack.c.l.b16 %v53
  %v138 = vpack.c.b16 %v107, %v106
  %v139 = vpack.c.b16 %v109, %v108
  %v140 = vpack.c.b16 %v111, %v110
  %v141 = vpack.c.b16 %v113, %v112
  %v142 = vpack.c.b16 %v115, %v114
  %v143 = vpack.c.b16 %v117, %v116
  %v144 = vpack.c.b16 %v119, %v118
  %v145 = vpack.c.b16 %v121, %v120
  %v146 = vpack.c.b16 %v123, %v122
  %v147 = vpack.c.b16 %v125, %v124
  %v148 = vpack.c.b16 %v127, %v126
  %v149 = vpack.c.b16 %v129, %v128
  %v150 = vpack.c.b16 %v131, %v130
  %v151 = vpack.c.b16 %v133, %v132
  %v152 = vpack.c.b16 %v135, %v134
  %v153 = vpack.c.b16 %v137, %v136
  %170 = vmatprep.subr.bf16.mxu0 0
  %171 = vmatpush1.bf16.msra.mxu0 %v138
  %172 = vmatprep.subr.bf16.mxu0 0
  %173 = vmatpush1.bf16.msra.mxu0 %v139
  %174 = vmatprep.subr.bf16.mxu0 0
  %175 = vmatpush1.bf16.msra.mxu0 %v140
  %176 = vmatprep.subr.bf16.mxu0 0
  %177 = vmatpush1.bf16.msra.mxu0 %v141
  %178 = vmatprep.subr.bf16.mxu0 0
  %179 = vmatpush1.bf16.msra.mxu0 %v142
  %180 = vmatprep.subr.bf16.mxu0 0
  %181 = vmatpush1.bf16.msra.mxu0 %v143
  %182 = vmatprep.subr.bf16.mxu0 0
  %183 = vmatpush1.bf16.msra.mxu0 %v144
  %184 = vmatprep.subr.bf16.mxu0 0
  %185 = vmatpush1.bf16.msra.mxu0 %v145
  %186 = vmatprep.subr.bf16.mxu0 0
  %187 = vmatpush1.bf16.msra.mxu0 %v146
  %188 = vmatprep.subr.bf16.mxu0 0
  %189 = vmatpush1.bf16.msra.mxu0 %v147
  %190 = vmatprep.subr.bf16.mxu0 0
  %191 = vmatpush1.bf16.msra.mxu0 %v148
  %192 = vmatprep.subr.bf16.mxu0 0
  %193 = vmatpush1.bf16.msra.mxu0 %v149
  %194 = vmatprep.subr.bf16.mxu0 0
  %195 = vmatpush1.bf16.msra.mxu0 %v150
  %196 = vmatprep.subr.bf16.mxu0 0
  %197 = vmatpush1.bf16.msra.mxu0 %v151
  %198 = vmatprep.subr.bf16.mxu0 0
  %199 = vmatpush1.bf16.msra.mxu0 %v152
  %200 = vmatprep.subr.bf16.mxu0 0
  %201 = vmatpush1.bf16.msra.mxu0 %v153
  %202 = vmatprep.mubr.bf16.mxu0 %v67
  %203 = vmatmul.mubr.bf16.gmra.mrb[0].mxu0 %v66
  %v204 = vpop.f32.mrb[0].mxu0
  %v205 = vadd.f32 0.0, %v204
  %v206 = vpop.f32.mrb[0].mxu0
  %v207 = vpop.f32.mrb[0].mxu0
  %v208 = vadd.f32 0.0, %v207
  %v209 = vpop.f32.mrb[0].mxu0
  %210 = vmatprep.mubr.bf16.mxu0 %v69
  %211 = vmatmul.mubr.bf16.gmra.mrb[0].mxu0 %v68
  %v212 = vpop.f32.mrb[0].mxu0
  %v213 = vadd.f32 0.0, %v212
  %v214 = vpop.f32.mrb[0].mxu0
  %v215 = vpop.f32.mrb[0].mxu0
  %v216 = vadd.f32 0.0, %v215
  %v217 = vpop.f32.mrb[0].mxu0
  %218 = vdwg.mxu0
  %s219 = smul.u32 0, 32
  %s220 = scalar_lea.vmem [#allocation2], %s219
  %221 = vst [vmem:[%s220] sm:$0xff] %v205
  %222 = vst [vmem:[%s220 + $0x8] sm:$0xff] %v208
  %223 = vst [vmem:[%s220 + $0x10] sm:$0xff] %v213
  %224 = vst [vmem:[%s220 + $0x18] sm:$0xff] %v216
  %v225 = vadd.f32 %v205, %v208
  %v226 = vadd.f32 %v225, %v213
  %v227 = vadd.f32 %v226, %v216
  %v228 = vrot.slane %v227, 4
  %v229 = vadd.f32 %v227, %v228
  %v230 = vrot.slane %v229, 2
  %v231 = vadd.f32 %v229, %v230
  %v232 = vrot.slane %v231, 1
  %v233 = vadd.f32 %v231, %v232
  %v234 = vmul.f32 %v205, %v205
  %v235 = vmul.f32 %v208, %v208
  %v236 = vmul.f32 %v213, %v213
  %v237 = vmul.f32 %v216, %v216
  %v238 = vadd.f32 %v234, %v235
  %v239 = vadd.f32 %v238, %v236
  %v240 = vadd.f32 %v239, %v237
  %v241 = vrot.slane %v240, 4
  %v242 = vadd.f32 %v240, %v241
  %v243 = vrot.slane %v242, 2
  %v244 = vadd.f32 %v242, %v243
  %v245 = vrot.slane %v244, 1
  %v246 = vadd.f32 %v244, %v245
  %p247 = scmp.eq.s32.totalorder 0, 0
  // Predicated region
  $region18: #{_lambda_.6} parent=0 // pred_check
    %p248 = pneg %p247
  $region19: #{_lambda_.6} parent=0 // pred_check_branch
    %250 = sbr.rel (%p248) target = $region21
  $region20: #{_lambda_.6} parent=0 // pred_region
    %251 = vst [vmem:[#allocation3] sm:$0x1] %v233
    %252 = vst [vmem:[#allocation4] sm:$0x1] %v246
  $region21: #{_lambda_.6} parent=0 // pred_fallthru
    _
  %p253 = scmp.gt.s32.totalorder 0, 0
  // Predicated region
  $region22: #{_lambda_.6} parent=0 // pred_check
    %p254 = pneg %p253
  $region23: #{_lambda_.6} parent=0 // pred_check_branch
    %256 = sbr.rel (%p254) target = $region25
  $region24: #{_lambda_.6} parent=0 // pred_region
    %v257 = vld [vmem:[#allocation3] sm:$0x1]
    %v258 = vadd.f32 %v257, %v233
    %259 = vst [vmem:[#allocation3] sm:$0x1] %v258
    %v260 = vld [vmem:[#allocation4] sm:$0x1]
    %v261 = vadd.f32 %v260, %v246
    %262 = vst [vmem:[#allocation4] sm:$0x1] %v261
  $region25: #{_lambda_.6} parent=0 // pred_fallthru
    _
  // Predicated region
  $region26: #{_lambda_.6} parent=0 // pred_check
    %p263 = pneg %p247
  $region27: #{_lambda_.6} parent=0 // pred_check_branch
    %265 = sbr.rel (%p263) target = $region29
  $region28: #{_lambda_.6} parent=0 // pred_region
    %v266 = vld [vmem:[#allocation3] sm:$0x1]
    %v267 = vmul.f32 %v266, 0.03125
    %v268 = vld [vmem:[#allocation4] sm:$0x1]
    %v269 = vmul.f32 %v268, 0.03125
    %v270 = vmul.f32 %v267, %v267
    %v271 = vsub.f32 %v269, %v270
    %v272 = vmax.f32 %v271, 0.0
    %v273 = vadd.f32 %v272, 1e-05
    %v274 = vrsqrt.pop %v273
    %v275 = vld [vmem:[%s2] sm:$0x1]
    %v276 = vmul.f32 %v275, %v274
    %v277 = vld [vmem:[%s3] sm:$0x1]
    %v278 = vmul.f32 %v267, %v276
    %v279 = vsub.f32 %v277, %v278
    %v280 = vld [vmem:[#allocation2] sm:$0xff]
    %v281 = vld [vmem:[#allocation2 + $0x8] sm:$0xff]
    %v282 = vld [vmem:[#allocation2 + $0x10] sm:$0xff]
    %v283 = vld [vmem:[#allocation2 + $0x18] sm:$0xff]
    %v285 = vlaneseq
    %v286 = vshrl.u32 %v285, 7
    %v287 = vsub.s32 0, %v286
    %v288 = vrot.slane %v276, %v287
    %v290 = vmul.f32 %v280, %v288
    %v291 = vmul.f32 %v281, %v288
    %v292 = vmul.f32 %v282, %v288
    %v293 = vmul.f32 %v283, %v288
    %v295 = vlaneseq
    %v296 = vshrl.u32 %v295, 7
    %v297 = vsub.s32 0, %v296
    %v298 = vrot.slane %v279, %v297
    %v300 = vadd.f32 %v290, %v298
    %v301 = vadd.f32 %v291, %v298
    %v302 = vadd.f32 %v292, %v298
    %v303 = vadd.f32 %v293, %v298
    %v304 = vmul.f32 %v300, 0.2
    %v305 = vmul.f32 %v301, 0.2
    %v306 = vmul.f32 %v302, 0.2
    %v307 = vmul.f32 %v303, 0.2
    %v308 = vmax.f32 %v300, %v304
    %v309 = vmax.f32 %v301, %v305
    %v310 = vmax.f32 %v302, %v306
    %v311 = vmax.f32 %v303, %v307
    %v312 = vpack.c.bf16 %v309, %v308
    %v313 = vpack.c.bf16 %v311, %v310
    %v316 = vunpack.c.l.b16 %v312
    %v317 = vunpack.c.h.b16 %v312
    %v318 = vunpack.c.l.b16 %v313
    %v319 = vunpack.c.h.b16 %v313
    %v320 = vpack.c.b16 %v316, %v316
    %v321 = vpack.c.b16 %v317, %v317
    %v322 = vpack.c.b16 %v318, %v318
    %v323 = vpack.c.b16 %v319, %v319
    %328 = vst [vmem:[%s4] sm:$0xf] %v320
    %329 = vst [vmem:[%s4 + $0x4] sm:$0xf] %v321
    %330 = vst [vmem:[%s4 + $0x8] sm:$0xf] %v322
    %331 = vst [vmem:[%s4 + $0xc] sm:$0xf] %v323
  $region29: #{_lambda_.6} parent=0 // pred_fallthru
    _
  // Predicated region
  $region30: #{_lambda_.6} parent=0 // pred_check
    _
  $region31: #{_lambda_.6} parent=0 // pred_check_branch
    %333 = sbr.rel (0) target = $region33
  $region32: #{_lambda_.6} parent=0 // pred_region
    _
  $region33: #{_lambda_.6} parent=0 // pred_fallthru
    _
  // Predicated region
  $region34: #{_lambda_.6} parent=0 // pred_check
    _
  $region35: #{_lambda_.6} parent=0 // pred_check_branch
    %335 = sbr.rel (0) target = $region37
  $region36: #{_lambda_.6} parent=0 // pred_region
    _
  $region37: #{_lambda_.6} parent=0 // pred_fallthru
    _

// kernel: _lambda_.7
$region0: #{_lambda_.7}
  #allocation0 [shape = 'u32[]', space=smem, size = 0x4, offset = 0x4, fixed_abs, tag = 'smem constant byte address 0x4 - core index']
  #allocation1 [shape = 'u32[144,128]{1,0:T(1,128)}', space=vmem, size = 0x12000, scoped, tag = 'internal scratch']
  #allocation2 [shape = 'f32[1,8,128]{2,1,0:T(8,128)}', space=vmem, size = 0x1000, scoped, tag = 'scratch operand']
  #allocation3 [shape = 'f32[1,128]{1,0:T(1,128)}', space=vmem, size = 0x200, scoped, tag = 'scratch operand']
  #allocation4 [shape = 'f32[1,128]{1,0:T(1,128)}', space=vmem, size = 0x200, scoped, tag = 'scratch operand']
  %s0 = inlined_call_operand.vmem [shape: bf16[8,512], index: 0, kind: input, shape index: {}]
  %s1 = inlined_call_operand.vmem [shape: bf16[512,128], index: 1, kind: input, shape index: {}]
  %s2 = inlined_call_operand.vmem [shape: f32[1,128], index: 2, kind: input, shape index: {}]
  %s3 = inlined_call_operand.vmem [shape: f32[1,128], index: 3, kind: input, shape index: {}]
  %s4 = inlined_call_operand.vmem [shape: bf16[8,128], index: 4, kind: output, shape index: {}]
  %s5 = sld [smem:[#allocation0]]
  $region38: #{_lambda_.7} parent=0
    _
  %s7 = ssub.s32 1, %s5
  %s8 = scalar_select 0, %s7, %s5
  // Predicated region
  $region2: #{_lambda_.7} parent=0 // pred_check
    _
  $region3: #{_lambda_.7} parent=0 // pred_check_branch
    %10 = sbr.rel (0) target = $region5
  $region4: #{_lambda_.7} parent=0 // pred_region
    _
  $region5: #{_lambda_.7} parent=0 // pred_fallthru
    _
  // Predicated region
  $region6: #{_lambda_.7} parent=0 // pred_check
    _
  $region7: #{_lambda_.7} parent=0 // pred_check_branch
    %12 = sbr.rel (0) target = $region9
  $region8: #{_lambda_.7} parent=0 // pred_region
    _
  $region9: #{_lambda_.7} parent=0 // pred_fallthru
    _
  // Predicated region
  $region10: #{_lambda_.7} parent=0 // pred_check
    _
  $region11: #{_lambda_.7} parent=0 // pred_check_branch
    %14 = sbr.rel (0) target = $region13
  $region12: #{_lambda_.7} parent=0 // pred_region
    _
  $region13: #{_lambda_.7} parent=0 // pred_fallthru
    _
  // Predicated region
  $region14: #{_lambda_.7} parent=0 // pred_check
    _
  $region15: #{_lambda_.7} parent=0 // pred_check_branch
    %16 = sbr.rel (0) target = $region17
  $region16: #{_lambda_.7} parent=0 // pred_region
    _
  $region17: #{_lambda_.7} parent=0 // pred_fallthru
    _
  %v18 = vld [vmem:[%s0] sm:$0xff]
  %v19 = vld [vmem:[%s0 + $0x8] sm:$0xff]
  %v20 = vld [vmem:[%s1] sm:$0xf]
  %v21 = vld [vmem:[%s1 + $0x4] sm:$0xf]
  %v22 = vld [vmem:[%s1 + $0x8] sm:$0xf]
  %v23 = vld [vmem:[%s1 + $0xc] sm:$0xf]
  %v24 = vld [vmem:[%s1 + $0x10] sm:$0xf]
  %v25 = vld [vmem:[%s1 + $0x14] sm:$0xf]
  %v26 = vld [vmem:[%s1 + $0x18] sm:$0xf]
  %v27 = vld [vmem:[%s1 + $0x1c] sm:$0xf]
  %v28 = vld [vmem:[%s1 + $0x20] sm:$0xf]
  %v29 = vld [vmem:[%s1 + $0x24] sm:$0xf]
  %v30 = vld [vmem:[%s1 + $0x28] sm:$0xf]
  %v31 = vld [vmem:[%s1 + $0x2c] sm:$0xf]
  %v32 = vld [vmem:[%s1 + $0x30] sm:$0xf]
  %v33 = vld [vmem:[%s1 + $0x34] sm:$0xf]
  %v34 = vld [vmem:[%s1 + $0x38] sm:$0xf]
  %v35 = vld [vmem:[%s1 + $0x3c] sm:$0xf]
  %v36 = vld [vmem:[%s1 + $0x40] sm:$0xf]
  %v37 = vld [vmem:[%s1 + $0x44] sm:$0xf]
  %v38 = vld [vmem:[%s1 + $0x48] sm:$0xf]
  %v39 = vld [vmem:[%s1 + $0x4c] sm:$0xf]
  %v40 = vld [vmem:[%s1 + $0x50] sm:$0xf]
  %v41 = vld [vmem:[%s1 + $0x54] sm:$0xf]
  %v42 = vld [vmem:[%s1 + $0x58] sm:$0xf]
  %v43 = vld [vmem:[%s1 + $0x5c] sm:$0xf]
  %v44 = vld [vmem:[%s1 + $0x60] sm:$0xf]
  %v45 = vld [vmem:[%s1 + $0x64] sm:$0xf]
  %v46 = vld [vmem:[%s1 + $0x68] sm:$0xf]
  %v47 = vld [vmem:[%s1 + $0x6c] sm:$0xf]
  %v48 = vld [vmem:[%s1 + $0x70] sm:$0xf]
  %v49 = vld [vmem:[%s1 + $0x74] sm:$0xf]
  %v50 = vld [vmem:[%s1 + $0x78] sm:$0xf]
  %v51 = vld [vmem:[%s1 + $0x7c] sm:$0xf]
  %v52 = vld [vmem:[%s1 + $0x80] sm:$0xf]
  %v53 = vld [vmem:[%s1 + $0x84] sm:$0xf]
  %v54 = vld [vmem:[%s1 + $0x88] sm:$0xf]
  %v55 = vld [vmem:[%s1 + $0x8c] sm:$0xf]
  %v56 = vld [vmem:[%s1 + $0x90] sm:$0xf]
  %v57 = vld [vmem:[%s1 + $0x94] sm:$0xf]
  %v58 = vld [vmem:[%s1 + $0x98] sm:$0xf]
  %v59 = vld [vmem:[%s1 + $0x9c] sm:$0xf]
  %v60 = vld [vmem:[%s1 + $0xa0] sm:$0xf]
  %v61 = vld [vmem:[%s1 + $0xa4] sm:$0xf]
  %v62 = vld [vmem:[%s1 + $0xa8] sm:$0xf]
  %v63 = vld [vmem:[%s1 + $0xac] sm:$0xf]
  %v64 = vld [vmem:[%s1 + $0xb0] sm:$0xf]
  %v65 = vld [vmem:[%s1 + $0xb4] sm:$0xf]
  %v66 = vld [vmem:[%s1 + $0xb8] sm:$0xf]
  %v67 = vld [vmem:[%s1 + $0xbc] sm:$0xf]
  %v68 = vld [vmem:[%s1 + $0xc0] sm:$0xf]
  %v69 = vld [vmem:[%s1 + $0xc4] sm:$0xf]
  %v70 = vld [vmem:[%s1 + $0xc8] sm:$0xf]
  %v71 = vld [vmem:[%s1 + $0xcc] sm:$0xf]
  %v72 = vld [vmem:[%s1 + $0xd0] sm:$0xf]
  %v73 = vld [vmem:[%s1 + $0xd4] sm:$0xf]
  %v74 = vld [vmem:[%s1 + $0xd8] sm:$0xf]
  %v75 = vld [vmem:[%s1 + $0xdc] sm:$0xf]
  %v76 = vld [vmem:[%s1 + $0xe0] sm:$0xf]
  %v77 = vld [vmem:[%s1 + $0xe4] sm:$0xf]
  %v78 = vld [vmem:[%s1 + $0xe8] sm:$0xf]
  %v79 = vld [vmem:[%s1 + $0xec] sm:$0xf]
  %v80 = vld [vmem:[%s1 + $0xf0] sm:$0xf]
  %v81 = vld [vmem:[%s1 + $0xf4] sm:$0xf]
  %v82 = vld [vmem:[%s1 + $0xf8] sm:$0xf]
  %v83 = vld [vmem:[%s1 + $0xfc] sm:$0xf]
  %v86 = vunpack.c.l.b16 %v18
  %v87 = vunpack.c.h.b16 %v18
  %v88 = vunpack.c.l.b16 %v19
  %v89 = vunpack.c.h.b16 %v19
  %v90 = vpack.c.b16 %v86, %v86
  %v91 = vpack.c.b16 %v87, %v87
  %v92 = vpack.c.b16 %v88, %v88
  %v93 = vpack.c.b16 %v89, %v89
  %v162 = vunpack.c.l.b16 %v20
  %v163 = vunpack.c.l.b16 %v21
  %v164 = vunpack.c.l.b16 %v22
  %v165 = vunpack.c.l.b16 %v23
  %v166 = vunpack.c.l.b16 %v24
  %v167 = vunpack.c.l.b16 %v25
  %v168 = vunpack.c.l.b16 %v26
  %v169 = vunpack.c.l.b16 %v27
  %v170 = vunpack.c.l.b16 %v28
  %v171 = vunpack.c.l.b16 %v29
  %v172 = vunpack.c.l.b16 %v30
  %v173 = vunpack.c.l.b16 %v31
  %v174 = vunpack.c.l.b16 %v32
  %v175 = vunpack.c.l.b16 %v33
  %v176 = vunpack.c.l.b16 %v34
  %v177 = vunpack.c.l.b16 %v35
  %v178 = vunpack.c.l.b16 %v36
  %v179 = vunpack.c.l.b16 %v37
  %v180 = vunpack.c.l.b16 %v38
  %v181 = vunpack.c.l.b16 %v39
  %v182 = vunpack.c.l.b16 %v40
  %v183 = vunpack.c.l.b16 %v41
  %v184 = vunpack.c.l.b16 %v42
  %v185 = vunpack.c.l.b16 %v43
  %v186 = vunpack.c.l.b16 %v44
  %v187 = vunpack.c.l.b16 %v45
  %v188 = vunpack.c.l.b16 %v46
  %v189 = vunpack.c.l.b16 %v47
  %v190 = vunpack.c.l.b16 %v48
  %v191 = vunpack.c.l.b16 %v49
  %v192 = vunpack.c.l.b16 %v50
  %v193 = vunpack.c.l.b16 %v51
  %v194 = vunpack.c.l.b16 %v52
  %v195 = vunpack.c.l.b16 %v53
  %v196 = vunpack.c.l.b16 %v54
  %v197 = vunpack.c.l.b16 %v55
  %v198 = vunpack.c.l.b16 %v56
  %v199 = vunpack.c.l.b16 %v57
  %v200 = vunpack.c.l.b16 %v58
  %v201 = vunpack.c.l.b16 %v59
  %v202 = vunpack.c.l.b16 %v60
  %v203 = vunpack.c.l.b16 %v61
  %v204 = vunpack.c.l.b16 %v62
  %v205 = vunpack.c.l.b16 %v63
  %v206 = vunpack.c.l.b16 %v64
  %v207 = vunpack.c.l.b16 %v65
  %v208 = vunpack.c.l.b16 %v66
  %v209 = vunpack.c.l.b16 %v67
  %v210 = vunpack.c.l.b16 %v68
  %v211 = vunpack.c.l.b16 %v69
  %v212 = vunpack.c.l.b16 %v70
  %v213 = vunpack.c.l.b16 %v71
  %v214 = vunpack.c.l.b16 %v72
  %v215 = vunpack.c.l.b16 %v73
  %v216 = vunpack.c.l.b16 %v74
  %v217 = vunpack.c.l.b16 %v75
  %v218 = vunpack.c.l.b16 %v76
  %v219 = vunpack.c.l.b16 %v77
  %v220 = vunpack.c.l.b16 %v78
  %v221 = vunpack.c.l.b16 %v79
  %v222 = vunpack.c.l.b16 %v80
  %v223 = vunpack.c.l.b16 %v81
  %v224 = vunpack.c.l.b16 %v82
  %v225 = vunpack.c.l.b16 %v83
  %v226 = vpack.c.b16 %v163, %v162
  %v227 = vpack.c.b16 %v165, %v164
  %v228 = vpack.c.b16 %v167, %v166
  %v229 = vpack.c.b16 %v169, %v168
  %v230 = vpack.c.b16 %v171, %v170
  %v231 = vpack.c.b16 %v173, %v172
  %v232 = vpack.c.b16 %v175, %v174
  %v233 = vpack.c.b16 %v177, %v176
  %v234 = vpack.c.b16 %v179, %v178
  %v235 = vpack.c.b16 %v181, %v180
  %v236 = vpack.c.b16 %v183, %v182
  %v237 = vpack.c.b16 %v185, %v184
  %v238 = vpack.c.b16 %v187, %v186
  %v239 = vpack.c.b16 %v189, %v188
  %v240 = vpack.c.b16 %v191, %v190
  %v241 = vpack.c.b16 %v193, %v192
  %v242 = vpack.c.b16 %v195, %v194
  %v243 = vpack.c.b16 %v197, %v196
  %v244 = vpack.c.b16 %v199, %v198
  %v245 = vpack.c.b16 %v201, %v200
  %v246 = vpack.c.b16 %v203, %v202
  %v247 = vpack.c.b16 %v205, %v204
  %v248 = vpack.c.b16 %v207, %v206
  %v249 = vpack.c.b16 %v209, %v208
  %v250 = vpack.c.b16 %v211, %v210
  %v251 = vpack.c.b16 %v213, %v212
  %v252 = vpack.c.b16 %v215, %v214
  %v253 = vpack.c.b16 %v217, %v216
  %v254 = vpack.c.b16 %v219, %v218
  %v255 = vpack.c.b16 %v221, %v220
  %v256 = vpack.c.b16 %v223, %v222
  %v257 = vpack.c.b16 %v225, %v224
  %290 = vmatprep.subr.bf16.mxu0 0
  %291 = vmatpush1.bf16.msra.mxu0 %v226
  %292 = vmatprep.subr.bf16.mxu0 0
  %293 = vmatpush1.bf16.msra.mxu0 %v227
  %294 = vmatprep.subr.bf16.mxu0 0
  %295 = vmatpush1.bf16.msra.mxu0 %v228
  %296 = vmatprep.subr.bf16.mxu0 0
  %297 = vmatpush1.bf16.msra.mxu0 %v229
  %298 = vmatprep.subr.bf16.mxu0 0
  %299 = vmatpush1.bf16.msra.mxu0 %v230
  %300 = vmatprep.subr.bf16.mxu0 0
  %301 = vmatpush1.bf16.msra.mxu0 %v231
  %302 = vmatprep.subr.bf16.mxu0 0
  %303 = vmatpush1.bf16.msra.mxu0 %v232
  %304 = vmatprep.subr.bf16.mxu0 0
  %305 = vmatpush1.bf16.msra.mxu0 %v233
  %306 = vmatprep.subr.bf16.mxu0 0
  %307 = vmatpush1.bf16.msra.mxu0 %v234
  %308 = vmatprep.subr.bf16.mxu0 0
  %309 = vmatpush1.bf16.msra.mxu0 %v235
  %310 = vmatprep.subr.bf16.mxu0 0
  %311 = vmatpush1.bf16.msra.mxu0 %v236
  %312 = vmatprep.subr.bf16.mxu0 0
  %313 = vmatpush1.bf16.msra.mxu0 %v237
  %314 = vmatprep.subr.bf16.mxu0 0
  %315 = vmatpush1.bf16.msra.mxu0 %v238
  %316 = vmatprep.subr.bf16.mxu0 0
  %317 = vmatpush1.bf16.msra.mxu0 %v239
  %318 = vmatprep.subr.bf16.mxu0 0
  %319 = vmatpush1.bf16.msra.mxu0 %v240
  %320 = vmatprep.subr.bf16.mxu0 0
  %321 = vmatpush1.bf16.msra.mxu0 %v241
  %322 = vmatprep.mubr.bf16.mxu0 %v91
  %323 = vmatmul.mubr.bf16.gmra.mrb[0].mxu0 %v90
  %v324 = vpop.f32.mrb[0].mxu0
  %v325 = vadd.f32 0.0, %v324
  %v326 = vpop.f32.mrb[0].mxu0
  %v327 = vpop.f32.mrb[0].mxu0
  %v328 = vpop.f32.mrb[0].mxu0
  %329 = vdwg.mxu0
  %330 = vmatprep.subr.bf16.mxu0 0
  %331 = vmatpush1.bf16.msra.mxu0 %v242
  %332 = vmatprep.subr.bf16.mxu0 0
  %333 = vmatpush1.bf16.msra.mxu0 %v243
  %334 = vmatprep.subr.bf16.mxu0 0
  %335 = vmatpush1.bf16.msra.mxu0 %v244
  %336 = vmatprep.subr.bf16.mxu0 0
  %337 = vmatpush1.bf16.msra.mxu0 %v245
  %338 = vmatprep.subr.bf16.mxu0 0
  %339 = vmatpush1.bf16.msra.mxu0 %v246
  %340 = vmatprep.subr.bf16.mxu0 0
  %341 = vmatpush1.bf16.msra.mxu0 %v247
  %342 = vmatprep.subr.bf16.mxu0 0
  %343 = vmatpush1.bf16.msra.mxu0 %v248
  %344 = vmatprep.subr.bf16.mxu0 0
  %345 = vmatpush1.bf16.msra.mxu0 %v249
  %346 = vmatprep.subr.bf16.mxu0 0
  %347 = vmatpush1.bf16.msra.mxu0 %v250
  %348 = vmatprep.subr.bf16.mxu0 0
  %349 = vmatpush1.bf16.msra.mxu0 %v251
  %350 = vmatprep.subr.bf16.mxu0 0
  %351 = vmatpush1.bf16.msra.mxu0 %v252
  %352 = vmatprep.subr.bf16.mxu0 0
  %353 = vmatpush1.bf16.msra.mxu0 %v253
  %354 = vmatprep.subr.bf16.mxu0 0
  %355 = vmatpush1.bf16.msra.mxu0 %v254
  %356 = vmatprep.subr.bf16.mxu0 0
  %357 = vmatpush1.bf16.msra.mxu0 %v255
  %358 = vmatprep.subr.bf16.mxu0 0
  %359 = vmatpush1.bf16.msra.mxu0 %v256
  %360 = vmatprep.subr.bf16.mxu0 0
  %361 = vmatpush1.bf16.msra.mxu0 %v257
  %362 = vmatprep.mubr.bf16.mxu0 %v93
  %363 = vmatmul.mubr.bf16.gmra.mrb[0].mxu0 %v92
  %v364 = vpop.f32.mrb[0].mxu0
  %v365 = vadd.f32 %v325, %v364
  %v366 = vpop.f32.mrb[0].mxu0
  %v367 = vpop.f32.mrb[0].mxu0
  %v368 = vpop.f32.mrb[0].mxu0
  %369 = vdwg.mxu0
  %s370 = smul.u32 0, 8
  %s371 = scalar_lea.vmem [#allocation2], %s370
  %372 = vst [vmem:[%s371] sm:$0xff] %v365
  %v373 = vrot.slane %v365, 4
  %v374 = vadd.f32 %v365, %v373
  %v375 = vrot.slane %v374, 2
  %v376 = vadd.f32 %v374, %v375
  %v377 = vrot.slane %v376, 1
  %v378 = vadd.f32 %v376, %v377
  %v379 = vmul.f32 %v365, %v365
  %v380 = vrot.slane %v379, 4
  %v381 = vadd.f32 %v379, %v380
  %v382 = vrot.slane %v381, 2
  %v383 = vadd.f32 %v381, %v382
  %v384 = vrot.slane %v383, 1
  %v385 = vadd.f32 %v383, %v384
  %p386 = scmp.eq.s32.totalorder 0, 0
  // Predicated region
  $region18: #{_lambda_.7} parent=0 // pred_check
    %p387 = pneg %p386
  $region19: #{_lambda_.7} parent=0 // pred_check_branch
    %389 = sbr.rel (%p387) target = $region21
  $region20: #{_lambda_.7} parent=0 // pred_region
    %390 = vst [vmem:[#allocation3] sm:$0x1] %v378
    %391 = vst [vmem:[#allocation4] sm:$0x1] %v385
  $region21: #{_lambda_.7} parent=0 // pred_fallthru
    _
  %p392 = scmp.gt.s32.totalorder 0, 0
  // Predicated region
  $region22: #{_lambda_.7} parent=0 // pred_check
    %p393 = pneg %p392
  $region23: #{_lambda_.7} parent=0 // pred_check_branch
    %395 = sbr.rel (%p393) target = $region25
  $region24: #{_lambda_.7} parent=0 // pred_region
    %v396 = vld [vmem:[#allocation3] sm:$0x1]
    %v397 = vadd.f32 %v396, %v378
    %398 = vst [vmem:[#allocation3] sm:$0x1] %v397
    %v399 = vld [vmem:[#allocation4] sm:$0x1]
    %v400 = vadd.f32 %v399, %v385
    %401 = vst [vmem:[#allocation4] sm:$0x1] %v400
  $region25: #{_lambda_.7} parent=0 // pred_fallthru
    _
  // Predicated region
  $region26: #{_lambda_.7} parent=0 // pred_check
    %p402 = pneg %p386
  $region27: #{_lambda_.7} parent=0 // pred_check_branch
    %404 = sbr.rel (%p402) target = $region29
  $region28: #{_lambda_.7} parent=0 // pred_region
    %v405 = vld [vmem:[#allocation3] sm:$0x1]
    %v406 = vmul.f32 %v405, 0.125
    %v407 = vld [vmem:[#allocation4] sm:$0x1]
    %v408 = vmul.f32 %v407, 0.125
    %v409 = vmul.f32 %v406, %v406
    %v410 = vsub.f32 %v408, %v409
    %v411 = vmax.f32 %v410, 0.0
    %v412 = vadd.f32 %v411, 1e-05
    %v413 = vrsqrt.pop %v412
    %v414 = vld [vmem:[%s2] sm:$0x1]
    %v415 = vmul.f32 %v414, %v413
    %v416 = vld [vmem:[%s3] sm:$0x1]
    %v417 = vmul.f32 %v406, %v415
    %v418 = vsub.f32 %v416, %v417
    %v419 = vld [vmem:[#allocation2] sm:$0xff]
    %v421 = vlaneseq
    %v422 = vshrl.u32 %v421, 7
    %v423 = vsub.s32 0, %v422
    %v424 = vrot.slane %v415, %v423
    %v426 = vmul.f32 %v419, %v424
    %v428 = vlaneseq
    %v429 = vshrl.u32 %v428, 7
    %v430 = vsub.s32 0, %v429
    %v431 = vrot.slane %v418, %v430
    %v433 = vadd.f32 %v426, %v431
    %v434 = vmul.f32 %v433, 0.2
    %v435 = vmax.f32 %v433, %v434
    %v436 = vpack.c.bf16 %v435, %v435
    %437 = vst [vmem:[%s4] sm:$0xf] %v436
  $region29: #{_lambda_.7} parent=0 // pred_fallthru
    _
  // Predicated region
  $region30: #{_lambda_.7} parent=0 // pred_check
    _
  $region31: #{_lambda_.7} parent=0 // pred_check_branch
    %439 = sbr.rel (0) target = $region33
  $region32: #{_lambda_.7} parent=0 // pred_region
    _
  $region33: #{_lambda_.7} parent=0 // pred_fallthru
    _
  // Predicated region
  $region34: #{_lambda_.7} parent=0 // pred_check
    _
  $region35: #{_lambda_.7} parent=0 // pred_check_branch
    %441 = sbr.rel (0) target = $region37
  $region36: #{_lambda_.7} parent=0 // pred_region
    _
  $region37: #{_lambda_.7} parent=0 // pred_fallthru
    _

</llo_original>
